<compile_context>
chip_gen: v7x
topology: tpu7x:2x2x1
jax: 0.10.0
libtpu: 0.0.40
codegen_flags: <defaults>
</compile_context>

<pallas_src>
import functools

import jax
import jax.numpy as jnp
from jax.experimental import pallas as pl
from jax.experimental.pallas import tpu as pltpu


_VMEM_LIMIT = 48 * 1024 * 1024   # headroom under v7x's 64 MiB physical VMEM


# ---------------------------------------------------------------------------
# Kernel 1: fused input projections.
#   q  = x @ (scale * Wq^T) + scale*bq          (softmax scale folded into Wq / bq)
#   kv = source @ [Wk^T | Wv^T] + [bk | bv]     (K and V share `source` -> one fused matmul)
# ---------------------------------------------------------------------------
def _proj_kernel(x_ref, s_ref, wq_ref, bq_ref, wkv_ref, bkv_ref, q_out, kv_out):
    q = jnp.dot(x_ref[0], wq_ref[...], preferred_element_type=jnp.float32) + bq_ref[...]
    kv = jnp.dot(s_ref[0], wkv_ref[...], preferred_element_type=jnp.float32) + bkv_ref[...]
    q_out[0] = q.astype(q_out.dtype)
    kv_out[0] = kv.astype(kv_out.dtype)


# ---------------------------------------------------------------------------
# Kernel 2: scaled dot-product attention for one (batch, head, query-tile).
#   q_ref: (1,1,TQ,D)   k_ref/v_ref: (1,1,M,D)   o_ref: (1,1,TQ,D)
# ---------------------------------------------------------------------------
def _attn_kernel(q_ref, k_ref, v_ref, o_ref):
    q = q_ref[0, 0]            # (TQ, D)
    k = k_ref[0, 0]            # (M, D)
    v = v_ref[0, 0]            # (M, D)
    # q @ k^T expressed via dimension numbers (no materialized transpose of K).
    s = jax.lax.dot_general(q, k, (((1,), (1,)), ((), ())),
                            preferred_element_type=jnp.float32)          # (TQ, M)
    s = s - jnp.max(s, axis=-1, keepdims=True)
    e = jnp.exp(s)
    denom = jnp.sum(e, axis=-1, keepdims=True)                           # (TQ, 1)
    o = jax.lax.dot_general(e.astype(v.dtype), v, (((1,), (0,)), ((), ())),
                            preferred_element_type=jnp.float32)          # (TQ, D)
    # Normalize after the PV matmul (N*D multiplies instead of N*M); reciprocal on EUP.
    o = o * pl.reciprocal(denom, approx=False)
    o_ref[0, 0] = o.astype(o_ref.dtype)


# ---------------------------------------------------------------------------
# Kernel 3: merge conv + concat + MLP([2F, 2F, F]) with InstanceNorm1d + ReLU.
#   x_ref: (1,N,F) original features   a_ref: (1,N,F) attention output (head-major channels)
# ---------------------------------------------------------------------------
def _merge_mlp_kernel(x_ref, a_ref, wm_ref, bm_ref, w1_ref, b1_ref, w2_ref, b2_ref,
                      o_ref, *, eps):
    msg = jnp.dot(a_ref[0], wm_ref[...], preferred_element_type=jnp.float32) + bm_ref[...]
    h = jnp.concatenate([x_ref[0].astype(jnp.float32), msg], axis=-1)     # (N, 2F)
    y = jnp.dot(h, w1_ref[...], preferred_element_type=jnp.float32) + b1_ref[...]
    # InstanceNorm1d: per-channel stats over the sequence axis, biased variance, no affine.
    mean = jnp.mean(y, axis=0, keepdims=True)
    var = jnp.mean(jnp.square(y - mean), axis=0, keepdims=True)
    y = (y - mean) * jax.lax.rsqrt(var + eps)
    y = jnp.maximum(y, 0.0)
    out = jnp.dot(y, w2_ref[...], preferred_element_type=jnp.float32) + b2_ref[...]
    o_ref[0] = out.astype(o_ref.dtype)


def _pick_q_tile(n):
    for t in (256, 128, 64, 32, 16, 8):
        if n % t == 0:
            return t
    return n   # fall back to untiled (block dim == full dim is always legal)


def attentional_propagation(x, source, params, num_heads, *, compute_dtype=jnp.float32):
    """x: (B, F, Nq), source: (B, F, M), float32, PyTorch NCW convention.

    params = (wq, bq, wk, bk, wv, bv, wm, bm, w1, b1, w2, b2) with Conv1d(k=1)
    weights squeezed to 2-D (out_channels, in_channels).
    Set compute_dtype=jnp.bfloat16 to feed the attention MXU matmuls in bf16
    (recommended on v6e/v7x; accumulation stays f32).
    """
    wq, bq, wk, bk, wv, bv, wm, bm, w1, b1, w2, b2 = params
    B, F, Nq = x.shape
    M = source.shape[2]
    H = num_heads
    assert F % H == 0
    D = F // H

    # ---- wrapper glue (plain JAX): weight prep + layout plumbing ----------
    # PyTorch views the conv output as (B, D, H, N): channel c -> (d=c//H, h=c%H).
    # Kernels use head-major channels c' = h*D + d  ->  perm[c'] = d*H + h.
    perm = jnp.asarray([d * H + h for h in range(H) for d in range(D)], dtype=jnp.int32)
    scale = 1.0 / (D ** 0.5)

    wq_k = wq[perm, :].T * scale                                    # scale folded into Wq/bq
    bq_k = (bq[perm] * scale)[None, :]
    wkv_k = jnp.concatenate([wk[perm, :].T, wv[perm, :].T], axis=1)  # (F, 2F) fused K|V
    bkv_k = jnp.concatenate([bk[perm], bv[perm]])[None, :]           # (1, 2F)
    wm_k = wm[:, perm].T                                             # head-major in -> orig out
    bm_k = bm[None, :]
    w1_k, b1_k = w1.T, b1[None, :]
    w2_k, b2_k = w2.T, b2[None, :]

    x_t = jnp.transpose(x, (0, 2, 1))        # (B, Nq, F)
    s_t = jnp.transpose(source, (0, 2, 1))   # (B, M,  F)

    rep1 = lambda shp: pl.BlockSpec(shp, lambda b: (0,) * len(shp))

    # ---- kernel 1: fused projections ---------------------------------------
    qp, kvp = pl.pallas_call(
        _proj_kernel,
        out_shape=(jax.ShapeDtypeStruct((B, Nq, F), compute_dtype),
                   jax.ShapeDtypeStruct((B, M, 2 * F), compute_dtype)),
        grid_spec=pltpu.PrefetchScalarGridSpec(
            num_scalar_prefetch=0,
            grid=(B,),
            in_specs=[
                pl.BlockSpec((1, Nq, F), lambda b: (b, 0, 0)),
                pl.BlockSpec((1, M, F), lambda b: (b, 0, 0)),
                rep1((F, F)), rep1((1, F)),
                rep1((F, 2 * F)), rep1((1, 2 * F)),
            ],
            out_specs=(pl.BlockSpec((1, Nq, F), lambda b: (b, 0, 0)),
                       pl.BlockSpec((1, M, 2 * F), lambda b: (b, 0, 0))),
        ),
        compiler_params=pltpu.CompilerParams(
            dimension_semantics=("parallel",), vmem_limit_bytes=_VMEM_LIMIT),
    )(x_t, s_t, wq_k, bq_k, wkv_k, bkv_k)

    # head split: (B, seq, F=H*D) -> (B, H, seq, D)   [layout plumbing outside kernels]
    q4 = qp.reshape(B, Nq, H, D).transpose(0, 2, 1, 3)
    k4 = kvp[:, :, :F].reshape(B, M, H, D).transpose(0, 2, 1, 3)
    v4 = kvp[:, :, F:].reshape(B, M, H, D).transpose(0, 2, 1, 3)

    # ---- kernel 2: attention, query-tiled, per (batch, head) ---------------
    TQ = _pick_q_tile(Nq)
    nq_tiles = Nq // TQ
    att4 = pl.pallas_call(
        _attn_kernel,
        out_shape=jax.ShapeDtypeStruct((B, H, Nq, D), jnp.float32),
        grid_spec=pltpu.PrefetchScalarGridSpec(
            num_scalar_prefetch=0,
            grid=(B, H, nq_tiles),
            in_specs=[
                pl.BlockSpec((1, 1, TQ, D), lambda b, h, i: (b, h, i, 0)),
                pl.BlockSpec((1, 1, M, D), lambda b, h, i: (b, h, 0, 0)),
                pl.BlockSpec((1, 1, M, D), lambda b, h, i: (b, h, 0, 0)),
            ],
            out_specs=pl.BlockSpec((1, 1, TQ, D), lambda b, h, i: (b, h, i, 0)),
        ),
        compiler_params=pltpu.CompilerParams(
            dimension_semantics=("parallel", "parallel", "parallel"),
            vmem_limit_bytes=_VMEM_LIMIT),
    )(q4, k4, v4)

    # head merge: (B, H, Nq, D) -> (B, Nq, F) head-major channels
    att = att4.transpose(0, 2, 1, 3).reshape(B, Nq, F)

    # ---- kernel 3: merge conv + concat + MLP (needs full N for InstanceNorm) ----
    kernel_m = functools.partial(_merge_mlp_kernel, eps=1e-5)
    out = pl.pallas_call(
        kernel_m,
        out_shape=jax.ShapeDtypeStruct((B, Nq, F), jnp.float32),
        grid_spec=pltpu.PrefetchScalarGridSpec(
            num_scalar_prefetch=0,
            grid=(B,),
            in_specs=[
                pl.BlockSpec((1, Nq, F), lambda b: (b, 0, 0)),
                pl.BlockSpec((1, Nq, F), lambda b: (b, 0, 0)),
                rep1((F, F)), rep1((1, F)),
                rep1((2 * F, 2 * F)), rep1((1, 2 * F)),
                rep1((2 * F, F)), rep1((1, F)),
            ],
            out_specs=pl.BlockSpec((1, Nq, F), lambda b: (b, 0, 0)),
        ),
        compiler_params=pltpu.CompilerParams(
            dimension_semantics=("parallel",), vmem_limit_bytes=_VMEM_LIMIT),
    )(x_t, att, wm_k, bm_k, w1_k, b1_k, w2_k, b2_k)

    return jnp.transpose(out, (0, 2, 1))   # back to (B, F, Nq)


def _reference(x, source, params, num_heads):
    """Pure-JAX replica of the PyTorch AttentionalPropagation forward (NCW)."""
    wq, bq, wk, bk, wv, bv, wm, bm, w1, b1, w2, b2 = params
    hi = jax.lax.Precision.HIGHEST
    conv = lambda t, W, b: jnp.einsum('oc,bcn->bon', W, t, precision=hi) + b[None, :, None]
    Q = conv(x, wq, bq)
    K = conv(source, wk, bk)
    V = conv(source, wv, bv)
    B, C, N = Q.shape
    M = K.shape[2]
    D = C // num_heads
    Qv = Q.reshape(B, D, num_heads, N)
    Kv = K.reshape(B, D, num_heads, M)
    Vv = V.reshape(B, D, num_heads, M)
    scores = jnp.einsum('bdhn,bdhm->bhnm', Qv, Kv, precision=hi) / (D ** 0.5)
    prob = jax.nn.softmax(scores, axis=-1)
    att = jnp.einsum('bhnm,bdhm->bdhn', prob, Vv, precision=hi).reshape(B, C, N)
    message = conv(att, wm, bm)
    h = jnp.concatenate([x, message], axis=1)                    # (B, 2C, N)
    y = conv(h, w1, b1)
    mean = jnp.mean(y, axis=2, keepdims=True)
    var = jnp.mean(jnp.square(y - mean), axis=2, keepdims=True)  # biased var (InstanceNorm1d)
    y = (y - mean) / jnp.sqrt(var + 1e-5)
    y = jnp.maximum(y, 0.0)
    return conv(y, w2, b2)


if __name__ == "__main__":
    B, feature_dim, num_heads = 2, 128, 4          # F multiple of 128 (lane-aligned)
    Nq, M = 512, 256                               # multiples of 8 / 128 (sublane-aligned)
    F2 = feature_dim * 2

    key0 = jax.random.PRNGKey(0)
    keys = jax.random.split(key0, 13)

    w_scale = 1.0 / (feature_dim ** 0.5)
    mk_w = lambda k, o, i: jax.random.normal(k, (o, i), jnp.float32) * w_scale
    mk_b = lambda k, o: jax.random.normal(k, (o,), jnp.float32) * w_scale

    params = (
        mk_w(keys[0], feature_dim, feature_dim), mk_b(keys[1], feature_dim),     # proj q
        mk_w(keys[2], feature_dim, feature_dim), mk_b(keys[3], feature_dim),     # proj k
        mk_w(keys[4], feature_dim, feature_dim), mk_b(keys[5], feature_dim),     # proj v
        mk_w(keys[6], feature_dim, feature_dim), mk_b(keys[7], feature_dim),     # merge
        mk_w(keys[8], F2, F2), mk_b(keys[9], F2),                                # mlp conv1
        mk_w(keys[10], feature_dim, F2),
        jnp.zeros((feature_dim,), jnp.float32),                                  # mlp conv2 (bias init 0)
    )

    x = jax.random.normal(keys[11], (B, feature_dim, Nq), jnp.float32)
    source = jax.random.normal(keys[12], (B, feature_dim, M), jnp.float32)

    out = attentional_propagation(x, source, params, num_heads)
    out = jax.block_until_ready(out)

    ref = _reference(x, source, params, num_heads)
    assert out.shape == (B, feature_dim, Nq)
    max_err = float(jnp.max(jnp.abs(out - ref)))
    assert jnp.allclose(out, ref, atol=1e-3, rtol=1e-3), f"max abs err {max_err}"

    print("KERNEL_OK")
</pallas_src>

<mosaic_0001>
module attributes {stable_mosaic.version = 11 : i64} {
  func.func @_proj_kernel(%arg0: i32, %arg1: memref<1x512x128xf32, #tpu.memory_space<vmem>>, %arg2: memref<1x256x128xf32, #tpu.memory_space<vmem>>, %arg3: memref<128x128xf32, #tpu.memory_space<vmem>>, %arg4: memref<1x128xf32, #tpu.memory_space<vmem>>, %arg5: memref<128x256xf32, #tpu.memory_space<vmem>>, %arg6: memref<1x256xf32, #tpu.memory_space<vmem>>, %arg7: memref<1x512x128xf32, #tpu.memory_space<vmem>>, %arg8: memref<1x256x256xf32, #tpu.memory_space<vmem>>) attributes {dimension_semantics = [#tpu.dimension_semantics<parallel>], iteration_bounds = array<i64: 2>, scalar_prefetch = 0 : i64, scratch_operands = 0 : i64, tpu.core_type = #tpu.core_type<tc>, window_params = [{transform_indices = @transform_0, window_bounds = array<i64: 1, 512, 128>}, {transform_indices = @transform_1, window_bounds = array<i64: 1, 256, 128>}, {pipeline_mode = #tpu.pipeline_mode<synchronous>, transform_indices = @transform_2, window_bounds = array<i64: 128, 128>}, {pipeline_mode = #tpu.pipeline_mode<synchronous>, transform_indices = @transform_3, window_bounds = array<i64: 1, 128>}, {pipeline_mode = #tpu.pipeline_mode<synchronous>, transform_indices = @transform_4, window_bounds = array<i64: 128, 256>}, {pipeline_mode = #tpu.pipeline_mode<synchronous>, transform_indices = @transform_5, window_bounds = array<i64: 1, 256>}, {transform_indices = @transform_6, window_bounds = array<i64: 1, 512, 128>}, {transform_indices = @transform_7, window_bounds = array<i64: 1, 256, 256>}]} {
    %c0 = arith.constant 0 : index
    %c0_0 = arith.constant 0 : index
    %c0_1 = arith.constant 0 : index
    %0 = vector.load %arg1[%c0, %c0_0, %c0_1] : memref<1x512x128xf32, #tpu.memory_space<vmem>>, vector<1x512x128xf32>
    %1 = vector.shape_cast %0 : vector<1x512x128xf32> to vector<512x128xf32>
    %c0_2 = arith.constant 0 : index
    %c0_3 = arith.constant 0 : index
    %2 = vector.load %arg3[%c0_2, %c0_3] : memref<128x128xf32, #tpu.memory_space<vmem>>, vector<128x128xf32>
    %cst = arith.constant dense<0.000000e+00> : vector<512x128xf32>
    %3 = tpu.matmul %1, %2, %cst {dimension_numbers = #tpu.dot_dimension_numbers<[1], [0], [0], [1], [0, 0, 1, 1], [], []>} : vector<512x128xf32>, vector<128x128xf32>, vector<512x128xf32> -> vector<512x128xf32>
    %c0_4 = arith.constant 0 : index
    %c0_5 = arith.constant 0 : index
    %4 = vector.load %arg4[%c0_4, %c0_5] : memref<1x128xf32, #tpu.memory_space<vmem>>, vector<1x128xf32>
    %5 = vector.broadcast %4 : vector<1x128xf32> to vector<512x128xf32>
    %6 = arith.addf %3, %5 : vector<512x128xf32>
    %c0_6 = arith.constant 0 : index
    %c0_7 = arith.constant 0 : index
    %c0_8 = arith.constant 0 : index
    %7 = vector.load %arg2[%c0_6, %c0_7, %c0_8] : memref<1x256x128xf32, #tpu.memory_space<vmem>>, vector<1x256x128xf32>
    %8 = vector.shape_cast %7 : vector<1x256x128xf32> to vector<256x128xf32>
    %c0_9 = arith.constant 0 : index
    %c0_10 = arith.constant 0 : index
    %9 = vector.load %arg5[%c0_9, %c0_10] : memref<128x256xf32, #tpu.memory_space<vmem>>, vector<128x256xf32>
    %cst_11 = arith.constant dense<0.000000e+00> : vector<256x256xf32>
    %10 = tpu.matmul %8, %9, %cst_11 {dimension_numbers = #tpu.dot_dimension_numbers<[1], [0], [0], [1], [0, 0, 1, 1], [], []>} : vector<256x128xf32>, vector<128x256xf32>, vector<256x256xf32> -> vector<256x256xf32>
    %c0_12 = arith.constant 0 : index
    %c0_13 = arith.constant 0 : index
    %11 = vector.load %arg6[%c0_12, %c0_13] : memref<1x256xf32, #tpu.memory_space<vmem>>, vector<1x256xf32>
    %12 = vector.broadcast %11 : vector<1x256xf32> to vector<256x256xf32>
    %13 = arith.addf %10, %12 : vector<256x256xf32>
    %c0_14 = arith.constant 0 : index
    %c0_15 = arith.constant 0 : index
    %c0_16 = arith.constant 0 : index
    %14 = vector.load %arg7[%c0_14, %c0_15, %c0_16] : memref<1x512x128xf32, #tpu.memory_space<vmem>>, vector<1x512x128xf32>
    %15 = vector.shape_cast %14 : vector<1x512x128xf32> to vector<512x128xf32>
    %16 = vector.shape_cast %6 : vector<512x128xf32> to vector<1x512x128xf32>
    tpu.vector_store %arg7[%c0_14, %c0_15, %c0_16], %16 {strides = array<i32>} : memref<1x512x128xf32, #tpu.memory_space<vmem>>, vector<1x512x128xf32>,
    %c0_17 = arith.constant 0 : index
    %c0_18 = arith.constant 0 : index
    %c0_19 = arith.constant 0 : index
    %17 = vector.load %arg8[%c0_17, %c0_18, %c0_19] : memref<1x256x256xf32, #tpu.memory_space<vmem>>, vector<1x256x256xf32>
    %18 = vector.shape_cast %17 : vector<1x256x256xf32> to vector<256x256xf32>
    %19 = vector.shape_cast %13 : vector<256x256xf32> to vector<1x256x256xf32>
    tpu.vector_store %arg8[%c0_17, %c0_18, %c0_19], %19 {strides = array<i32>} : memref<1x256x256xf32, #tpu.memory_space<vmem>>, vector<1x256x256xf32>,
    return
  }
  func.func @transform_0(%arg0: i32) -> (i32, i32, i32) {
    %c0_i32 = arith.constant 0 : i32
    %c0_i32_0 = arith.constant 0 : i32
    %c0_i32_1 = arith.constant 0 : i32
    return %arg0, %c0_i32, %c0_i32_0 : i32, i32, i32
  }
  func.func @transform_1(%arg0: i32) -> (i32, i32, i32) {
    %c0_i32 = arith.constant 0 : i32
    %c0_i32_0 = arith.constant 0 : i32
    %c0_i32_1 = arith.constant 0 : i32
    return %arg0, %c0_i32, %c0_i32_0 : i32, i32, i32
  }
  func.func @transform_2(%arg0: i32) -> (i32, i32) {
    %c0_i32 = arith.constant 0 : i32
    %c0_i32_0 = arith.constant 0 : i32
    %c0_i32_1 = arith.constant 0 : i32
    return %c0_i32, %c0_i32_0 : i32, i32
  }
  func.func @transform_3(%arg0: i32) -> (i32, i32) {
    %c0_i32 = arith.constant 0 : i32
    %c0_i32_0 = arith.constant 0 : i32
    %c0_i32_1 = arith.constant 0 : i32
    return %c0_i32, %c0_i32_0 : i32, i32
  }
  func.func @transform_4(%arg0: i32) -> (i32, i32) {
    %c0_i32 = arith.constant 0 : i32
    %c0_i32_0 = arith.constant 0 : i32
    %c0_i32_1 = arith.constant 0 : i32
    return %c0_i32, %c0_i32_0 : i32, i32
  }
  func.func @transform_5(%arg0: i32) -> (i32, i32) {
    %c0_i32 = arith.constant 0 : i32
    %c0_i32_0 = arith.constant 0 : i32
    %c0_i32_1 = arith.constant 0 : i32
    return %c0_i32, %c0_i32_0 : i32, i32
  }
  func.func @transform_6(%arg0: i32) -> (i32, i32, i32) {
    %c0_i32 = arith.constant 0 : i32
    %c0_i32_0 = arith.constant 0 : i32
    %c0_i32_1 = arith.constant 0 : i32
    return %arg0, %c0_i32, %c0_i32_0 : i32, i32, i32
  }
  func.func @transform_7(%arg0: i32) -> (i32, i32, i32) {
    %c0_i32 = arith.constant 0 : i32
    %c0_i32_0 = arith.constant 0 : i32
    %c0_i32_1 = arith.constant 0 : i32
    return %arg0, %c0_i32, %c0_i32_0 : i32, i32, i32
  }
}

</mosaic_0001>

<llo_original>
// kernel: tpu_custom_call.1
$region0: #{tpu_custom_call.1}
  #allocation0 [shape = 'u32[]', space=smem, size = 0x4, offset = 0x4, fixed_abs, tag = 'smem constant byte address 0x4 - core index']
  #allocation1 [shape = 'u32[144,128]{1,0:T(1,128)}', space=vmem, size = 0x12000, scoped, tag = 'internal scratch']
  %s0 = inlined_call_operand.hbm [shape: f32[2,512,128], index: 0, kind: input, shape index: {}]
  %s1 = inlined_call_operand.hbm [shape: f32[2,256,128], index: 1, kind: input, shape index: {}]
  %s2 = inlined_call_operand.hbm [shape: f32[128,128], index: 2, kind: input, shape index: {}]
  %s3 = inlined_call_operand.vmem [shape: f32[1,128], index: 3, kind: input, shape index: {}]
  %s4 = inlined_call_operand.hbm [shape: f32[128,256], index: 4, kind: input, shape index: {}]
  %s5 = inlined_call_operand.vmem [shape: f32[1,256], index: 5, kind: input, shape index: {}]
  %s6 = inlined_call_operand.hbm [shape: f32[2,512,128], index: 6, kind: output, shape index: {0}]
  %s7 = inlined_call_operand.hbm [shape: f32[2,256,256], index: 7, kind: output, shape index: {1}]
  %8 = xla_tuple %s6, %s7
  %s9 = sld [smem:[#allocation0]]
  $region81: #{tpu_custom_call.1} parent=0
    _
  %s11 = ssub.s32 1, %s9
  %s12 = scalar_select 0, %s11, %s9
  $region1: #{tpu_custom_call.1} parent=0
    #allocation2 [shape = 'u8[524288]{0}', space=vmem, size = 0x80000, scoped, tag = 'input window, operand 0']
    #allocation3 [shape = 's32[2]{0}', space=sflag, size = 0x8, scoped, tag = 'scoped memory for tpu_custom_call.1']
    #allocation4 [shape = 's32[2]{0}', space=sflag, size = 0x8, scoped, tag = 'scoped memory for tpu_custom_call.1']
    #allocation5 [shape = 'u8[262144]{0}', space=vmem, size = 0x40000, scoped, tag = 'input window, operand 1']
    #allocation6 [shape = 's32[2]{0}', space=sflag, size = 0x8, scoped, tag = 'scoped memory for tpu_custom_call.1']
    #allocation7 [shape = 'u8[65536]{0}', space=vmem, size = 0x10000, scoped, tag = 'input window, operand 2, single buffered']
    #allocation8 [shape = 'u8[131072]{0}', space=vmem, size = 0x20000, scoped, tag = 'input window, operand 4, single buffered']
    #allocation9 [shape = 's32[1]{0}', space=sflag, size = 0x4, scoped, tag = 'scoped memory for tpu_custom_call.1']
    #allocation10 [shape = 'u8[524288]{0}', space=vmem, size = 0x80000, scoped, tag = 'output window, operand 0']
    #allocation11 [shape = 'u8[524288]{0}', space=vmem, size = 0x80000, scoped, tag = 'output window, operand 1']
    #allocation12 [shape = 's32[2]{0}', space=sflag, size = 0x8, scoped, tag = 'scoped memory for tpu_custom_call.1']
    %13 = vsyncpa [#allocation3], 0
    %s14 = scalar_lea.sflag [#allocation3], 1
    %15 = vsyncpa %s14, 0
    %16 = vsyncpa [#allocation6], 0
    %s17 = scalar_lea.sflag [#allocation6], 1
    %18 = vsyncpa %s17, 0
    %19 = vsyncpa [#allocation9], 0
    %20 = vsyncpa [#allocation4], 0
    %s21 = scalar_lea.sflag [#allocation4], 1
    %22 = vsyncpa %s21, 0
    %23 = vsyncpa [#allocation12], 0
    %s24 = scalar_lea.sflag [#allocation12], 1
    %25 = vsyncpa %s24, 0
    loop: start=0, step=1, limit=4
    $region2: #{tpu_custom_call.1} parent=1 // loop_pre_header
      _
    $region3: #{tpu_custom_call.1} parent=1 // loop_header
      %s27 = sphi 0, %s31
      %p28 = scmp.ge.s32.totalorder %s27, 4
      %s37 = sphi 0, %s39
      %s40 = sphi 0, %s37
      %s41 = sphi 0, %s40
      %s57 = sphi 0, %s41
      %s63 = sphi 0, %s65
      %s66 = sphi 0, %s63
      %s67 = sphi 0, %s66
      %s83 = sphi 0, %s67
      %s87 = sphi 0, %s87
      %s89 = sphi 0, %s87
      %s90 = sphi 0, %s89
      %s104 = sphi 0, %s90
      %s108 = sphi 0, %s108
      %s110 = sphi 0, %s108
      %s111 = sphi 0, %s110
      %s125 = sphi 0, %s111
      %s129 = sphi 0, %s129
      %s131 = sphi 0, %s129
      %s132 = sphi 0, %s131
      %s146 = sphi 0, %s132
      %s150 = sphi 0, %s150
      %s152 = sphi 0, %s150
      %s153 = sphi 0, %s152
      %s167 = sphi 0, %s153
      %s173 = sphi 0, %s175
      %s176 = sphi 0, %s173
      %s177 = sphi 0, %s176
      %s193 = sphi 0, %s177
      %s199 = sphi 0, %s201
      %s202 = sphi 0, %s199
      %s203 = sphi 0, %s202
      %s219 = sphi 0, %s203
    $region4: #{tpu_custom_call.1} parent=1 // loop_header_branch
      %30 = sbr.rel (%p28) target = $region8
    $region5: #{tpu_custom_call.1} parent=1 // loop_body
      %s32 = ssub.s32 %s27, 1
      %s33 = ssub.s32 %s27, 2
      %s34 = sadd.s32 %s27, 1
      %s35 = ssub.s32 %s27, %s34
      %p36 = scmp.eq.s32.totalorder %s35, 0
      %s38 = sadd.s32 %s37, 1
      %s39 = scalar_select %p36, %s37, %s38
      %p42 = pneg %p36
      %p43 = scmp.eq.s32.totalorder %s27, 1
      %p44 = por %p42, %p43
      %p45 = scmp.ne.s32.totalorder %s37, %s40
      %p46 = scmp.eq.s32.totalorder %s27, 0
      %p47 = por %p45, %p46
      %p48 = scmp.ne.s32.totalorder %s37, %s40
      %p49 = scmp.eq.s32.totalorder %s32, 1
      %p50 = por %p48, %p49
      %p51 = scmp.ne.s32.totalorder %s40, %s41
      %p52 = scmp.eq.s32.totalorder %s32, 0
      %p53 = por %p51, %p52
      %p54 = scmp.ne.s32.totalorder %s40, %s41
      %p55 = scmp.eq.s32.totalorder %s33, 1
      %p56 = por %p54, %p55
      %p58 = scmp.ne.s32.totalorder %s41, %s57
      %p59 = scmp.eq.s32.totalorder %s33, 0
      %p60 = por %p58, %p59
      %s61 = ssub.s32 %s27, %s34
      %p62 = scmp.eq.s32.totalorder %s61, 0
      %s64 = sadd.s32 %s63, 1
      %s65 = scalar_select %p62, %s63, %s64
      %p68 = pneg %p62
      %p69 = scmp.eq.s32.totalorder %s27, 1
      %p70 = por %p68, %p69
      %p71 = scmp.ne.s32.totalorder %s63, %s66
      %p72 = scmp.eq.s32.totalorder %s27, 0
      %p73 = por %p71, %p72
      %p74 = scmp.ne.s32.totalorder %s63, %s66
      %p75 = scmp.eq.s32.totalorder %s32, 1
      %p76 = por %p74, %p75
      %p77 = scmp.ne.s32.totalorder %s66, %s67
      %p78 = scmp.eq.s32.totalorder %s32, 0
      %p79 = por %p77, %p78
      %p80 = scmp.ne.s32.totalorder %s66, %s67
      %p81 = scmp.eq.s32.totalorder %s33, 1
      %p82 = por %p80, %p81
      %p84 = scmp.ne.s32.totalorder %s67, %s83
      %p85 = scmp.eq.s32.totalorder %s33, 0
      %p86 = por %p84, %p85
      %s88 = sadd.s32 %s87, 1
      %p91 = scmp.eq.s32.totalorder %s27, 1
      %p92 = scmp.ne.s32.totalorder %s87, %s89
      %p93 = scmp.eq.s32.totalorder %s27, 0
      %p94 = por %p92, %p93
      %p95 = scmp.ne.s32.totalorder %s87, %s89
      %p96 = scmp.eq.s32.totalorder %s32, 1
      %p97 = por %p95, %p96
      %p98 = scmp.ne.s32.totalorder %s89, %s90
      %p99 = scmp.eq.s32.totalorder %s32, 0
      %p100 = por %p98, %p99
      %p101 = scmp.ne.s32.totalorder %s89, %s90
      %p102 = scmp.eq.s32.totalorder %s33, 1
      %p103 = por %p101, %p102
      %p105 = scmp.ne.s32.totalorder %s90, %s104
      %p106 = scmp.eq.s32.totalorder %s33, 0
      %p107 = por %p105, %p106
      %s109 = sadd.s32 %s108, 1
      %p112 = scmp.eq.s32.totalorder %s27, 1
      %p113 = scmp.ne.s32.totalorder %s108, %s110
      %p114 = scmp.eq.s32.totalorder %s27, 0
      %p115 = por %p113, %p114
      %p116 = scmp.ne.s32.totalorder %s108, %s110
      %p117 = scmp.eq.s32.totalorder %s32, 1
      %p118 = por %p116, %p117
      %p119 = scmp.ne.s32.totalorder %s110, %s111
      %p120 = scmp.eq.s32.totalorder %s32, 0
      %p121 = por %p119, %p120
      %p122 = scmp.ne.s32.totalorder %s110, %s111
      %p123 = scmp.eq.s32.totalorder %s33, 1
      %p124 = por %p122, %p123
      %p126 = scmp.ne.s32.totalorder %s111, %s125
      %p127 = scmp.eq.s32.totalorder %s33, 0
      %p128 = por %p126, %p127
      %s130 = sadd.s32 %s129, 1
      %p133 = scmp.eq.s32.totalorder %s27, 1
      %p134 = scmp.ne.s32.totalorder %s129, %s131
      %p135 = scmp.eq.s32.totalorder %s27, 0
      %p136 = por %p134, %p135
      %p137 = scmp.ne.s32.totalorder %s129, %s131
      %p138 = scmp.eq.s32.totalorder %s32, 1
      %p139 = por %p137, %p138
      %p140 = scmp.ne.s32.totalorder %s131, %s132
      %p141 = scmp.eq.s32.totalorder %s32, 0
      %p142 = por %p140, %p141
      %p143 = scmp.ne.s32.totalorder %s131, %s132
      %p144 = scmp.eq.s32.totalorder %s33, 1
      %p145 = por %p143, %p144
      %p147 = scmp.ne.s32.totalorder %s132, %s146
      %p148 = scmp.eq.s32.totalorder %s33, 0
      %p149 = por %p147, %p148
      %s151 = sadd.s32 %s150, 1
      %p154 = scmp.eq.s32.totalorder %s27, 1
      %p155 = scmp.ne.s32.totalorder %s150, %s152
      %p156 = scmp.eq.s32.totalorder %s27, 0
      %p157 = por %p155, %p156
      %p158 = scmp.ne.s32.totalorder %s150, %s152
      %p159 = scmp.eq.s32.totalorder %s32, 1
      %p160 = por %p158, %p159
      %p161 = scmp.ne.s32.totalorder %s152, %s153
      %p162 = scmp.eq.s32.totalorder %s32, 0
      %p163 = por %p161, %p162
      %p164 = scmp.ne.s32.totalorder %s152, %s153
      %p165 = scmp.eq.s32.totalorder %s33, 1
      %p166 = por %p164, %p165
      %p168 = scmp.ne.s32.totalorder %s153, %s167
      %p169 = scmp.eq.s32.totalorder %s33, 0
      %p170 = por %p168, %p169
      %s171 = ssub.s32 %s27, %s34
      %p172 = scmp.eq.s32.totalorder %s171, 0
      %s174 = sadd.s32 %s173, 1
      %s175 = scalar_select %p172, %s173, %s174
      %p178 = pneg %p172
      %p179 = scmp.eq.s32.totalorder %s27, 1
      %p180 = por %p178, %p179
      %p181 = scmp.ne.s32.totalorder %s173, %s176
      %p182 = scmp.eq.s32.totalorder %s27, 0
      %p183 = por %p181, %p182
      %p184 = scmp.ne.s32.totalorder %s173, %s176
      %p185 = scmp.eq.s32.totalorder %s32, 1
      %p186 = por %p184, %p185
      %p187 = scmp.ne.s32.totalorder %s176, %s177
      %p188 = scmp.eq.s32.totalorder %s32, 0
      %p189 = por %p187, %p188
      %p190 = scmp.ne.s32.totalorder %s176, %s177
      %p191 = scmp.eq.s32.totalorder %s33, 1
      %p192 = por %p190, %p191
      %p194 = scmp.ne.s32.totalorder %s177, %s193
      %p195 = scmp.eq.s32.totalorder %s33, 0
      %p196 = por %p194, %p195
      %s197 = ssub.s32 %s27, %s34
      %p198 = scmp.eq.s32.totalorder %s197, 0
      %s200 = sadd.s32 %s199, 1
      %s201 = scalar_select %p198, %s199, %s200
      %p204 = pneg %p198
      %p205 = scmp.eq.s32.totalorder %s27, 1
      %p206 = por %p204, %p205
      %p207 = scmp.ne.s32.totalorder %s199, %s202
      %p208 = scmp.eq.s32.totalorder %s27, 0
      %p209 = por %p207, %p208
      %p210 = scmp.ne.s32.totalorder %s199, %s202
      %p211 = scmp.eq.s32.totalorder %s32, 1
      %p212 = por %p210, %p211
      %p213 = scmp.ne.s32.totalorder %s202, %s203
      %p214 = scmp.eq.s32.totalorder %s32, 0
      %p215 = por %p213, %p214
      %p216 = scmp.ne.s32.totalorder %s202, %s203
      %p217 = scmp.eq.s32.totalorder %s33, 1
      %p218 = por %p216, %p217
      %p220 = scmp.ne.s32.totalorder %s203, %s219
      %p221 = scmp.eq.s32.totalorder %s33, 0
      %p222 = por %p220, %p221
      %p223 = scmp.le.s32.totalorder 1, %s27
      %p224 = scmp.lt.s32.totalorder %s27, 3
      %p225 = pnand %p223, %p224
      %p226 = pneg %p225
      // Predicated region
      $region9: #{tpu_custom_call.1} parent=5 // pred_check
        _
      $region10: #{tpu_custom_call.1} parent=5 // pred_check_branch
        %228 = sbr.rel (%p225) target = $region12
      $region11: #{tpu_custom_call.1} parent=5 // pred_region
        %s229 = ssub.s32 %s27, 1
        // Predicated region
        $region13: #{tpu_custom_call.1} parent=11 // pred_check
          %p230 = pneg %p100
        $region14: #{tpu_custom_call.1} parent=11 // pred_check_branch
          %232 = sbr.rel (%p230) target = $region16
        $region15: #{tpu_custom_call.1} parent=11 // pred_region
          %s234 = ssub.s32 2048, 2048
          %235 = vsyncadd [#allocation6], %s234
          %s236 = sshll.u32 [#allocation7], 4
          %s237 = int_to_ptr.vmem [resolvable:$true] %s236
          %242 = dma.hbm_to_vmem [thread:$0]  %s2, 2048, %s237, [#allocation6], 128, 128, 8
        $region16: #{tpu_custom_call.1} parent=11 // pred_fallthru
          _
        // Predicated region
        $region17: #{tpu_custom_call.1} parent=11 // pred_check
          %p243 = pneg %p121
        $region18: #{tpu_custom_call.1} parent=11 // pred_check_branch
          %245 = sbr.rel (%p243) target = $region20
        $region19: #{tpu_custom_call.1} parent=11 // pred_region
          _
        $region20: #{tpu_custom_call.1} parent=11 // pred_fallthru
          _
        // Predicated region
        $region21: #{tpu_custom_call.1} parent=11 // pred_check
          %p246 = pneg %p142
        $region22: #{tpu_custom_call.1} parent=11 // pred_check_branch
          %248 = sbr.rel (%p246) target = $region24
        $region23: #{tpu_custom_call.1} parent=11 // pred_region
          %s250 = ssub.s32 4096, 4096
          %251 = vsyncadd [#allocation9], %s250
          %s252 = sshll.u32 [#allocation8], 4
          %s253 = int_to_ptr.vmem [resolvable:$true] %s252
          %258 = dma.hbm_to_vmem [thread:$0]  %s4, 4096, %s253, [#allocation9], 256, 256, 16
        $region24: #{tpu_custom_call.1} parent=11 // pred_fallthru
          _
        // Predicated region
        $region25: #{tpu_custom_call.1} parent=11 // pred_check
          %p259 = pneg %p163
        $region26: #{tpu_custom_call.1} parent=11 // pred_check_branch
          %261 = sbr.rel (%p259) target = $region28
        $region27: #{tpu_custom_call.1} parent=11 // pred_region
          _
        $region28: #{tpu_custom_call.1} parent=11 // pred_fallthru
          _
      $region12: #{tpu_custom_call.1} parent=5 // pred_fallthru
        _
      %p262 = scmp.lt.s32.totalorder %s27, 2
      // Predicated region
      $region29: #{tpu_custom_call.1} parent=5 // pred_check
        %p263 = pneg %p262
      $region30: #{tpu_custom_call.1} parent=5 // pred_check_branch
        %265 = sbr.rel (%p263) target = $region32
      $region31: #{tpu_custom_call.1} parent=5 // pred_region
        // Predicated region
        $region33: #{tpu_custom_call.1} parent=31 // pred_check
          %p266 = pneg %p47
        $region34: #{tpu_custom_call.1} parent=31 // pred_check_branch
          %268 = sbr.rel (%p266) target = $region36
        $region35: #{tpu_custom_call.1} parent=31 // pred_region
          %s269 = sand.u32 %s37, 1
          %s270 = scalar_lea.sflag [#allocation3], %s269
          %s271 = sand.u32 %s37, 1
          %s272 = smul.addr %s271, 512
          %s273 = scalar_lea.vmem [#allocation2], %s272
          %s275 = ssub.s32 8192, 8192
          %276 = vsyncadd %s270, %s275
          %s277 = smul.addr %s27, 64
          %s278 = smul.addr %s277, 128
          %s279 = scalar_lea.hbm %s0, %s278
          %s280 = sshll.u32 %s273, 4
          %s281 = int_to_ptr.vmem [resolvable:$true] %s280
          %286 = dma.hbm_to_vmem [thread:$0]  %s279, 8192, %s281, %s270, 128, 128, 8
        $region36: #{tpu_custom_call.1} parent=31 // pred_fallthru
          _
        // Predicated region
        $region37: #{tpu_custom_call.1} parent=31 // pred_check
          %p287 = pneg %p73
        $region38: #{tpu_custom_call.1} parent=31 // pred_check_branch
          %289 = sbr.rel (%p287) target = $region40
        $region39: #{tpu_custom_call.1} parent=31 // pred_region
          %s290 = sand.u32 %s27, 1
          %s291 = scalar_lea.sflag [#allocation6], %s290
          %s292 = sand.u32 %s63, 1
          %s293 = smul.addr %s292, 256
          %s294 = scalar_lea.vmem [#allocation5], %s293
          %s296 = ssub.s32 4096, 4096
          %297 = vsyncadd %s291, %s296
          %s298 = smul.addr %s27, 32
          %s299 = smul.addr %s298, 128
          %s300 = scalar_lea.hbm %s1, %s299
          %s301 = sshll.u32 %s294, 4
          %s302 = int_to_ptr.vmem [resolvable:$true] %s301
          %307 = dma.hbm_to_vmem [thread:$0]  %s300, 4096, %s302, %s291, 128, 128, 8
        $region40: #{tpu_custom_call.1} parent=31 // pred_fallthru
          _
      $region32: #{tpu_custom_call.1} parent=5 // pred_fallthru
        _
      %p308 = scmp.le.s32.totalorder 1, %s27
      %p309 = scmp.lt.s32.totalorder %s27, 3
      %p310 = pnand %p308, %p309
      %p311 = pneg %p310
      // Predicated region
      $region41: #{tpu_custom_call.1} parent=5 // pred_check
        _
      $region42: #{tpu_custom_call.1} parent=5 // pred_check_branch
        %313 = sbr.rel (%p310) target = $region44
      $region43: #{tpu_custom_call.1} parent=5 // pred_region
        %s314 = ssub.s32 %s27, 1
        %s315 = sand.u32 %s40, 1
        %s316 = scalar_lea.sflag [#allocation3], %s315
        %s317 = sand.u32 %s40, 1
        %s318 = smul.addr %s317, 512
        %s319 = scalar_lea.vmem [#allocation2], %s318
        // Predicated region
        $region45: #{tpu_custom_call.1} parent=43 // pred_check
          %p320 = pneg %p53
        $region46: #{tpu_custom_call.1} parent=43 // pred_check_branch
          %322 = sbr.rel (%p320) target = $region48
        $region47: #{tpu_custom_call.1} parent=43 // pred_region
          %323 = dma.done %s316, 8192
        $region48: #{tpu_custom_call.1} parent=43 // pred_fallthru
          _
        %s324 = sand.u32 %s32, 1
        %s325 = scalar_lea.sflag [#allocation6], %s324
        %s326 = sand.u32 %s66, 1
        %s327 = smul.addr %s326, 256
        %s328 = scalar_lea.vmem [#allocation5], %s327
        // Predicated region
        $region49: #{tpu_custom_call.1} parent=43 // pred_check
          %p329 = pneg %p79
        $region50: #{tpu_custom_call.1} parent=43 // pred_check_branch
          %331 = sbr.rel (%p329) target = $region52
        $region51: #{tpu_custom_call.1} parent=43 // pred_region
          %332 = dma.done %s325, 4096
        $region52: #{tpu_custom_call.1} parent=43 // pred_fallthru
          _
        // Predicated region
        $region53: #{tpu_custom_call.1} parent=43 // pred_check
          %p333 = pneg %p100
        $region54: #{tpu_custom_call.1} parent=43 // pred_check_branch
          %335 = sbr.rel (%p333) target = $region56
        $region55: #{tpu_custom_call.1} parent=43 // pred_region
          %336 = dma.done [#allocation6], 2048
        $region56: #{tpu_custom_call.1} parent=43 // pred_fallthru
          _
        // Predicated region
        $region57: #{tpu_custom_call.1} parent=43 // pred_check
          %p337 = pneg %p142
        $region58: #{tpu_custom_call.1} parent=43 // pred_check_branch
          %339 = sbr.rel (%p337) target = $region60
        $region59: #{tpu_custom_call.1} parent=43 // pred_region
          %340 = dma.done [#allocation9], 4096
        $region60: #{tpu_custom_call.1} parent=43 // pred_fallthru
          _
        %s341 = sand.u32 %s40, 1
        %s342 = scalar_lea.sflag [#allocation3], %s341
        %s343 = sand.u32 %s40, 1
        %s344 = smul.addr %s343, 512
        %s345 = scalar_lea.vmem [#allocation2], %s344
        %p346 = pneg %p53
        %p347 = pneg %p50
        %s348 = sand.u32 %s32, 1
        %s349 = scalar_lea.sflag [#allocation6], %s348
        %s350 = sand.u32 %s66, 1
        %s351 = smul.addr %s350, 256
        %s352 = scalar_lea.vmem [#allocation5], %s351
        %p353 = pneg %p79
        %p354 = pneg %p76
        %p355 = pneg %p100
        %p356 = pneg %p97
        %p357 = pneg %p121
        %p358 = pneg %p118
        %p359 = pneg %p142
        %p360 = pneg %p139
        %p361 = pneg %p163
        %p362 = pneg %p160
        %p363 = pneg %p189
        %p364 = pneg %p186
        %s365 = sand.u32 %s176, 1
        %s366 = scalar_lea.sflag [#allocation4], %s365
        %s367 = sand.u32 %s176, 1
        %s368 = smul.addr %s367, 512
        %s369 = scalar_lea.vmem [#allocation10], %s368
        %p370 = pneg %p215
        %p371 = pneg %p212
        %s372 = sand.u32 %s202, 1
        %s373 = scalar_lea.sflag [#allocation12], %s372
        %s374 = sand.u32 %s202, 1
        %s375 = smul.addr %s374, 512
        %s376 = scalar_lea.vmem [#allocation11], %s375
        %v377 = vld [vmem:[%s319] sm:$0xff]
        %v378 = vld [vmem:[%s319 + $0x8] sm:$0xff]
        %v379 = vld [vmem:[%s319 + $0x10] sm:$0xff]
        %v380 = vld [vmem:[%s319 + $0x18] sm:$0xff]
        %v381 = vld [vmem:[%s319 + $0x20] sm:$0xff]
        %v382 = vld [vmem:[%s319 + $0x28] sm:$0xff]
        %v383 = vld [vmem:[%s319 + $0x30] sm:$0xff]
        %v384 = vld [vmem:[%s319 + $0x38] sm:$0xff]
        %v385 = vld [vmem:[%s319 + $0x40] sm:$0xff]
        %v386 = vld [vmem:[%s319 + $0x48] sm:$0xff]
        %v387 = vld [vmem:[%s319 + $0x50] sm:$0xff]
        %v388 = vld [vmem:[%s319 + $0x58] sm:$0xff]
        %v389 = vld [vmem:[%s319 + $0x60] sm:$0xff]
        %v390 = vld [vmem:[%s319 + $0x68] sm:$0xff]
        %v391 = vld [vmem:[%s319 + $0x70] sm:$0xff]
        %v392 = vld [vmem:[%s319 + $0x78] sm:$0xff]
        %v393 = vld [vmem:[%s319 + $0x80] sm:$0xff]
        %v394 = vld [vmem:[%s319 + $0x88] sm:$0xff]
        %v395 = vld [vmem:[%s319 + $0x90] sm:$0xff]
        %v396 = vld [vmem:[%s319 + $0x98] sm:$0xff]
        %v397 = vld [vmem:[%s319 + $0xa0] sm:$0xff]
        %v398 = vld [vmem:[%s319 + $0xa8] sm:$0xff]
        %v399 = vld [vmem:[%s319 + $0xb0] sm:$0xff]
        %v400 = vld [vmem:[%s319 + $0xb8] sm:$0xff]
        %v401 = vld [vmem:[%s319 + $0xc0] sm:$0xff]
        %v402 = vld [vmem:[%s319 + $0xc8] sm:$0xff]
        %v403 = vld [vmem:[%s319 + $0xd0] sm:$0xff]
        %v404 = vld [vmem:[%s319 + $0xd8] sm:$0xff]
        %v405 = vld [vmem:[%s319 + $0xe0] sm:$0xff]
        %v406 = vld [vmem:[%s319 + $0xe8] sm:$0xff]
        %v407 = vld [vmem:[%s319 + $0xf0] sm:$0xff]
        %v408 = vld [vmem:[%s319 + $0xf8] sm:$0xff]
        %v409 = vld [vmem:[%s319 + $0x100] sm:$0xff]
        %v410 = vld [vmem:[%s319 + $0x108] sm:$0xff]
        %v411 = vld [vmem:[%s319 + $0x110] sm:$0xff]
        %v412 = vld [vmem:[%s319 + $0x118] sm:$0xff]
        %v413 = vld [vmem:[%s319 + $0x120] sm:$0xff]
        %v414 = vld [vmem:[%s319 + $0x128] sm:$0xff]
        %v415 = vld [vmem:[%s319 + $0x130] sm:$0xff]
        %v416 = vld [vmem:[%s319 + $0x138] sm:$0xff]
        %v417 = vld [vmem:[%s319 + $0x140] sm:$0xff]
        %v418 = vld [vmem:[%s319 + $0x148] sm:$0xff]
        %v419 = vld [vmem:[%s319 + $0x150] sm:$0xff]
        %v420 = vld [vmem:[%s319 + $0x158] sm:$0xff]
        %v421 = vld [vmem:[%s319 + $0x160] sm:$0xff]
        %v422 = vld [vmem:[%s319 + $0x168] sm:$0xff]
        %v423 = vld [vmem:[%s319 + $0x170] sm:$0xff]
        %v424 = vld [vmem:[%s319 + $0x178] sm:$0xff]
        %v425 = vld [vmem:[%s319 + $0x180] sm:$0xff]
        %v426 = vld [vmem:[%s319 + $0x188] sm:$0xff]
        %v427 = vld [vmem:[%s319 + $0x190] sm:$0xff]
        %v428 = vld [vmem:[%s319 + $0x198] sm:$0xff]
        %v429 = vld [vmem:[%s319 + $0x1a0] sm:$0xff]
        %v430 = vld [vmem:[%s319 + $0x1a8] sm:$0xff]
        %v431 = vld [vmem:[%s319 + $0x1b0] sm:$0xff]
        %v432 = vld [vmem:[%s319 + $0x1b8] sm:$0xff]
        %v433 = vld [vmem:[%s319 + $0x1c0] sm:$0xff]
        %v434 = vld [vmem:[%s319 + $0x1c8] sm:$0xff]
        %v435 = vld [vmem:[%s319 + $0x1d0] sm:$0xff]
        %v436 = vld [vmem:[%s319 + $0x1d8] sm:$0xff]
        %v437 = vld [vmem:[%s319 + $0x1e0] sm:$0xff]
        %v438 = vld [vmem:[%s319 + $0x1e8] sm:$0xff]
        %v439 = vld [vmem:[%s319 + $0x1f0] sm:$0xff]
        %v440 = vld [vmem:[%s319 + $0x1f8] sm:$0xff]
        %v441 = vld [vmem:[#allocation7] sm:$0xff]
        %v442 = vld [vmem:[#allocation7 + $0x8] sm:$0xff]
        %v443 = vld [vmem:[#allocation7 + $0x10] sm:$0xff]
        %v444 = vld [vmem:[#allocation7 + $0x18] sm:$0xff]
        %v445 = vld [vmem:[#allocation7 + $0x20] sm:$0xff]
        %v446 = vld [vmem:[#allocation7 + $0x28] sm:$0xff]
        %v447 = vld [vmem:[#allocation7 + $0x30] sm:$0xff]
        %v448 = vld [vmem:[#allocation7 + $0x38] sm:$0xff]
        %v449 = vld [vmem:[#allocation7 + $0x40] sm:$0xff]
        %v450 = vld [vmem:[#allocation7 + $0x48] sm:$0xff]
        %v451 = vld [vmem:[#allocation7 + $0x50] sm:$0xff]
        %v452 = vld [vmem:[#allocation7 + $0x58] sm:$0xff]
        %v453 = vld [vmem:[#allocation7 + $0x60] sm:$0xff]
        %v454 = vld [vmem:[#allocation7 + $0x68] sm:$0xff]
        %v455 = vld [vmem:[#allocation7 + $0x70] sm:$0xff]
        %v456 = vld [vmem:[#allocation7 + $0x78] sm:$0xff]
        %v457 = vld [vmem:[%s3] sm:$0x1]
        %v459 = vlaneseq
        %v460 = vshrl.u32 %v459, 7
        %v461 = vsub.s32 0, %v460
        %v462 = vrot.slane %v457, %v461
        %464 = vmatprep.subr.mxu0 0.0
        %465 = vmatpush1.msra.mxu0 %v441
        %466 = vmatprep.subr.mxu0 0.0
        %467 = vmatpush1.msra.mxu0 %v442
        %468 = vmatprep.subr.mxu0 0.0
        %469 = vmatpush1.msra.mxu0 %v443
        %470 = vmatprep.subr.mxu0 0.0
        %471 = vmatpush1.msra.mxu0 %v444
        %472 = vmatprep.subr.mxu0 0.0
        %473 = vmatpush1.msra.mxu0 %v445
        %474 = vmatprep.subr.mxu0 0.0
        %475 = vmatpush1.msra.mxu0 %v446
        %476 = vmatprep.subr.mxu0 0.0
        %477 = vmatpush1.msra.mxu0 %v447
        %478 = vmatprep.subr.mxu0 0.0
        %479 = vmatpush1.msra.mxu0 %v448
        %480 = vmatprep.subr.mxu0 0.0
        %481 = vmatpush1.msra.mxu0 %v449
        %482 = vmatprep.subr.mxu0 0.0
        %483 = vmatpush1.msra.mxu0 %v450
        %484 = vmatprep.subr.mxu0 0.0
        %485 = vmatpush1.msra.mxu0 %v451
        %486 = vmatprep.subr.mxu0 0.0
        %487 = vmatpush1.msra.mxu0 %v452
        %488 = vmatprep.subr.mxu0 0.0
        %489 = vmatpush1.msra.mxu0 %v453
        %490 = vmatprep.subr.mxu0 0.0
        %491 = vmatpush1.msra.mxu0 %v454
        %492 = vmatprep.subr.mxu0 0.0
        %493 = vmatpush1.msra.mxu0 %v455
        %494 = vmatprep.subr.mxu0 0.0
        %495 = vmatpush1.msra.mxu0 %v456
        %496 = vmatprep.subr.mxu0 0.0
        %497 = vmatpush1.msra.mxu0 0.0
        %498 = vmatprep.subr.mxu0 0.0
        %499 = vmatpush1.msra.mxu0 0.0
        %500 = vmatprep.subr.mxu0 0.0
        %501 = vmatpush1.msra.mxu0 0.0
        %502 = vmatprep.subr.mxu0 0.0
        %503 = vmatpush1.msra.mxu0 0.0
        %504 = vmatprep.subr.mxu0 0.0
        %505 = vmatpush1.msra.mxu0 0.0
        %506 = vmatprep.subr.mxu0 0.0
        %507 = vmatpush1.msra.mxu0 0.0
        %508 = vmatprep.subr.mxu0 0.0
        %509 = vmatpush1.msra.mxu0 0.0
        %510 = vmatprep.subr.mxu0 0.0
        %511 = vmatpush1.msra.mxu0 0.0
        %512 = vmatprep.subr.mxu0 0.0
        %513 = vmatpush1.msra.mxu0 0.0
        %514 = vmatprep.subr.mxu0 0.0
        %515 = vmatpush1.msra.mxu0 0.0
        %516 = vmatprep.subr.mxu0 0.0
        %517 = vmatpush1.msra.mxu0 0.0
        %518 = vmatprep.subr.mxu0 0.0
        %519 = vmatpush1.msra.mxu0 0.0
        %520 = vmatprep.subr.mxu0 0.0
        %521 = vmatpush1.msra.mxu0 0.0
        %522 = vmatprep.subr.mxu0 0.0
        %523 = vmatpush1.msra.mxu0 0.0
        %524 = vmatprep.subr.mxu0 0.0
        %525 = vmatpush1.msra.mxu0 0.0
        %526 = vmatprep.subr.mxu0 0.0
        %527 = vmatpush1.msra.mxu0 0.0
        %528 = vmatprep.mubr.f32.mxu0 0.0
        %529 = vmatmul.mubr.f32.gmra.mrb[0].mxu0 %v377
        %v530 = vpop.f32.mrb[0].mxu0
        %v531 = vadd.f32 %v462, %v530
        %v532 = vpop.f32.mrb[0].mxu0
        %533 = vmatprep.mubr.f32.mxu0 0.0
        %534 = vmatmul.mubr.f32.gmra.mrb[0].mxu0 %v378
        %v535 = vpop.f32.mrb[0].mxu0
        %v536 = vadd.f32 %v462, %v535
        %v537 = vpop.f32.mrb[0].mxu0
        %538 = vmatprep.mubr.f32.mxu0 0.0
        %539 = vmatmul.mubr.f32.gmra.mrb[0].mxu0 %v379
        %v540 = vpop.f32.mrb[0].mxu0
        %v541 = vadd.f32 %v462, %v540
        %v542 = vpop.f32.mrb[0].mxu0
        %543 = vmatprep.mubr.f32.mxu0 0.0
        %544 = vmatmul.mubr.f32.gmra.mrb[0].mxu0 %v380
        %v545 = vpop.f32.mrb[0].mxu0
        %v546 = vadd.f32 %v462, %v545
        %v547 = vpop.f32.mrb[0].mxu0
        %548 = vmatprep.mubr.f32.mxu0 0.0
        %549 = vmatmul.mubr.f32.gmra.mrb[0].mxu0 %v381
        %v550 = vpop.f32.mrb[0].mxu0
        %v551 = vadd.f32 %v462, %v550
        %v552 = vpop.f32.mrb[0].mxu0
        %553 = vmatprep.mubr.f32.mxu0 0.0
        %554 = vmatmul.mubr.f32.gmra.mrb[0].mxu0 %v382
        %v555 = vpop.f32.mrb[0].mxu0
        %v556 = vadd.f32 %v462, %v555
        %v557 = vpop.f32.mrb[0].mxu0
        %558 = vmatprep.mubr.f32.mxu0 0.0
        %559 = vmatmul.mubr.f32.gmra.mrb[0].mxu0 %v383
        %v560 = vpop.f32.mrb[0].mxu0
        %v561 = vadd.f32 %v462, %v560
        %v562 = vpop.f32.mrb[0].mxu0
        %563 = vmatprep.mubr.f32.mxu0 0.0
        %564 = vmatmul.mubr.f32.gmra.mrb[0].mxu0 %v384
        %v565 = vpop.f32.mrb[0].mxu0
        %v566 = vadd.f32 %v462, %v565
        %v567 = vpop.f32.mrb[0].mxu0
        %568 = vmatprep.mubr.f32.mxu0 0.0
        %569 = vmatmul.mubr.f32.gmra.mrb[0].mxu0 %v385
        %v570 = vpop.f32.mrb[0].mxu0
        %v571 = vadd.f32 %v462, %v570
        %v572 = vpop.f32.mrb[0].mxu0
        %573 = vmatprep.mubr.f32.mxu0 0.0
        %574 = vmatmul.mubr.f32.gmra.mrb[0].mxu0 %v386
        %v575 = vpop.f32.mrb[0].mxu0
        %v576 = vadd.f32 %v462, %v575
        %v577 = vpop.f32.mrb[0].mxu0
        %578 = vmatprep.mubr.f32.mxu0 0.0
        %579 = vmatmul.mubr.f32.gmra.mrb[0].mxu0 %v387
        %v580 = vpop.f32.mrb[0].mxu0
        %v581 = vadd.f32 %v462, %v580
        %v582 = vpop.f32.mrb[0].mxu0
        %583 = vmatprep.mubr.f32.mxu0 0.0
        %584 = vmatmul.mubr.f32.gmra.mrb[0].mxu0 %v388
        %v585 = vpop.f32.mrb[0].mxu0
        %v586 = vadd.f32 %v462, %v585
        %v587 = vpop.f32.mrb[0].mxu0
        %588 = vmatprep.mubr.f32.mxu0 0.0
        %589 = vmatmul.mubr.f32.gmra.mrb[0].mxu0 %v389
        %v590 = vpop.f32.mrb[0].mxu0
        %v591 = vadd.f32 %v462, %v590
        %v592 = vpop.f32.mrb[0].mxu0
        %593 = vmatprep.mubr.f32.mxu0 0.0
        %594 = vmatmul.mubr.f32.gmra.mrb[0].mxu0 %v390
        %v595 = vpop.f32.mrb[0].mxu0
        %v596 = vadd.f32 %v462, %v595
        %v597 = vpop.f32.mrb[0].mxu0
        %598 = vmatprep.mubr.f32.mxu0 0.0
        %599 = vmatmul.mubr.f32.gmra.mrb[0].mxu0 %v391
        %v600 = vpop.f32.mrb[0].mxu0
        %v601 = vadd.f32 %v462, %v600
        %v602 = vpop.f32.mrb[0].mxu0
        %603 = vmatprep.mubr.f32.mxu0 0.0
        %604 = vmatmul.mubr.f32.gmra.mrb[0].mxu0 %v392
        %v605 = vpop.f32.mrb[0].mxu0
        %v606 = vadd.f32 %v462, %v605
        %v607 = vpop.f32.mrb[0].mxu0
        %608 = vmatprep.mubr.f32.mxu0 0.0
        %609 = vmatmul.mubr.f32.gmra.mrb[0].mxu0 %v393
        %v610 = vpop.f32.mrb[0].mxu0
        %v611 = vadd.f32 %v462, %v610
        %v612 = vpop.f32.mrb[0].mxu0
        %613 = vmatprep.mubr.f32.mxu0 0.0
        %614 = vmatmul.mubr.f32.gmra.mrb[0].mxu0 %v394
        %v615 = vpop.f32.mrb[0].mxu0
        %v616 = vadd.f32 %v462, %v615
        %v617 = vpop.f32.mrb[0].mxu0
        %618 = vmatprep.mubr.f32.mxu0 0.0
        %619 = vmatmul.mubr.f32.gmra.mrb[0].mxu0 %v395
        %v620 = vpop.f32.mrb[0].mxu0
        %v621 = vadd.f32 %v462, %v620
        %v622 = vpop.f32.mrb[0].mxu0
        %623 = vmatprep.mubr.f32.mxu0 0.0
        %624 = vmatmul.mubr.f32.gmra.mrb[0].mxu0 %v396
        %v625 = vpop.f32.mrb[0].mxu0
        %v626 = vadd.f32 %v462, %v625
        %v627 = vpop.f32.mrb[0].mxu0
        %628 = vmatprep.mubr.f32.mxu0 0.0
        %629 = vmatmul.mubr.f32.gmra.mrb[0].mxu0 %v397
        %v630 = vpop.f32.mrb[0].mxu0
        %v631 = vadd.f32 %v462, %v630
        %v632 = vpop.f32.mrb[0].mxu0
        %633 = vmatprep.mubr.f32.mxu0 0.0
        %634 = vmatmul.mubr.f32.gmra.mrb[0].mxu0 %v398
        %v635 = vpop.f32.mrb[0].mxu0
        %v636 = vadd.f32 %v462, %v635
        %v637 = vpop.f32.mrb[0].mxu0
        %638 = vmatprep.mubr.f32.mxu0 0.0
        %639 = vmatmul.mubr.f32.gmra.mrb[0].mxu0 %v399
        %v640 = vpop.f32.mrb[0].mxu0
        %v641 = vadd.f32 %v462, %v640
        %v642 = vpop.f32.mrb[0].mxu0
        %643 = vmatprep.mubr.f32.mxu0 0.0
        %644 = vmatmul.mubr.f32.gmra.mrb[0].mxu0 %v400
        %v645 = vpop.f32.mrb[0].mxu0
        %v646 = vadd.f32 %v462, %v645
        %v647 = vpop.f32.mrb[0].mxu0
        %648 = vmatprep.mubr.f32.mxu0 0.0
        %649 = vmatmul.mubr.f32.gmra.mrb[0].mxu0 %v401
        %v650 = vpop.f32.mrb[0].mxu0
        %v651 = vadd.f32 %v462, %v650
        %v652 = vpop.f32.mrb[0].mxu0
        %653 = vmatprep.mubr.f32.mxu0 0.0
        %654 = vmatmul.mubr.f32.gmra.mrb[0].mxu0 %v402
        %v655 = vpop.f32.mrb[0].mxu0
        %v656 = vadd.f32 %v462, %v655
        %v657 = vpop.f32.mrb[0].mxu0
        %658 = vmatprep.mubr.f32.mxu0 0.0
        %659 = vmatmul.mubr.f32.gmra.mrb[0].mxu0 %v403
        %v660 = vpop.f32.mrb[0].mxu0
        %v661 = vadd.f32 %v462, %v660
        %v662 = vpop.f32.mrb[0].mxu0
        %663 = vmatprep.mubr.f32.mxu0 0.0
        %664 = vmatmul.mubr.f32.gmra.mrb[0].mxu0 %v404
        %v665 = vpop.f32.mrb[0].mxu0
        %v666 = vadd.f32 %v462, %v665
        %v667 = vpop.f32.mrb[0].mxu0
        %668 = vmatprep.mubr.f32.mxu0 0.0
        %669 = vmatmul.mubr.f32.gmra.mrb[0].mxu0 %v405
        %v670 = vpop.f32.mrb[0].mxu0
        %v671 = vadd.f32 %v462, %v670
        %v672 = vpop.f32.mrb[0].mxu0
        %673 = vmatprep.mubr.f32.mxu0 0.0
        %674 = vmatmul.mubr.f32.gmra.mrb[0].mxu0 %v406
        %v675 = vpop.f32.mrb[0].mxu0
        %v676 = vadd.f32 %v462, %v675
        %v677 = vpop.f32.mrb[0].mxu0
        %678 = vmatprep.mubr.f32.mxu0 0.0
        %679 = vmatmul.mubr.f32.gmra.mrb[0].mxu0 %v407
        %v680 = vpop.f32.mrb[0].mxu0
        %v681 = vadd.f32 %v462, %v680
        %v682 = vpop.f32.mrb[0].mxu0
        %683 = vmatprep.mubr.f32.mxu0 0.0
        %684 = vmatmul.mubr.f32.gmra.mrb[0].mxu0 %v408
        %v685 = vpop.f32.mrb[0].mxu0
        %v686 = vadd.f32 %v462, %v685
        %v687 = vpop.f32.mrb[0].mxu0
        %688 = vmatprep.mubr.f32.mxu0 0.0
        %689 = vmatmul.mubr.f32.gmra.mrb[0].mxu0 %v409
        %v690 = vpop.f32.mrb[0].mxu0
        %v691 = vadd.f32 %v462, %v690
        %v692 = vpop.f32.mrb[0].mxu0
        %693 = vmatprep.mubr.f32.mxu0 0.0
        %694 = vmatmul.mubr.f32.gmra.mrb[0].mxu0 %v410
        %v695 = vpop.f32.mrb[0].mxu0
        %v696 = vadd.f32 %v462, %v695
        %v697 = vpop.f32.mrb[0].mxu0
        %698 = vmatprep.mubr.f32.mxu0 0.0
        %699 = vmatmul.mubr.f32.gmra.mrb[0].mxu0 %v411
        %v700 = vpop.f32.mrb[0].mxu0
        %v701 = vadd.f32 %v462, %v700
        %v702 = vpop.f32.mrb[0].mxu0
        %703 = vmatprep.mubr.f32.mxu0 0.0
        %704 = vmatmul.mubr.f32.gmra.mrb[0].mxu0 %v412
        %v705 = vpop.f32.mrb[0].mxu0
        %v706 = vadd.f32 %v462, %v705
        %v707 = vpop.f32.mrb[0].mxu0
        %708 = vmatprep.mubr.f32.mxu0 0.0
        %709 = vmatmul.mubr.f32.gmra.mrb[0].mxu0 %v413
        %v710 = vpop.f32.mrb[0].mxu0
        %v711 = vadd.f32 %v462, %v710
        %v712 = vpop.f32.mrb[0].mxu0
        %713 = vmatprep.mubr.f32.mxu0 0.0
        %714 = vmatmul.mubr.f32.gmra.mrb[0].mxu0 %v414
        %v715 = vpop.f32.mrb[0].mxu0
        %v716 = vadd.f32 %v462, %v715
        %v717 = vpop.f32.mrb[0].mxu0
        %718 = vmatprep.mubr.f32.mxu0 0.0
        %719 = vmatmul.mubr.f32.gmra.mrb[0].mxu0 %v415
        %v720 = vpop.f32.mrb[0].mxu0
        %v721 = vadd.f32 %v462, %v720
        %v722 = vpop.f32.mrb[0].mxu0
        %723 = vmatprep.mubr.f32.mxu0 0.0
        %724 = vmatmul.mubr.f32.gmra.mrb[0].mxu0 %v416
        %v725 = vpop.f32.mrb[0].mxu0
        %v726 = vadd.f32 %v462, %v725
        %v727 = vpop.f32.mrb[0].mxu0
        %728 = vmatprep.mubr.f32.mxu0 0.0
        %729 = vmatmul.mubr.f32.gmra.mrb[0].mxu0 %v417
        %v730 = vpop.f32.mrb[0].mxu0
        %v731 = vadd.f32 %v462, %v730
        %v732 = vpop.f32.mrb[0].mxu0
        %733 = vmatprep.mubr.f32.mxu0 0.0
        %734 = vmatmul.mubr.f32.gmra.mrb[0].mxu0 %v418
        %v735 = vpop.f32.mrb[0].mxu0
        %v736 = vadd.f32 %v462, %v735
        %v737 = vpop.f32.mrb[0].mxu0
        %738 = vmatprep.mubr.f32.mxu0 0.0
        %739 = vmatmul.mubr.f32.gmra.mrb[0].mxu0 %v419
        %v740 = vpop.f32.mrb[0].mxu0
        %v741 = vadd.f32 %v462, %v740
        %v742 = vpop.f32.mrb[0].mxu0
        %743 = vmatprep.mubr.f32.mxu0 0.0
        %744 = vmatmul.mubr.f32.gmra.mrb[0].mxu0 %v420
        %v745 = vpop.f32.mrb[0].mxu0
        %v746 = vadd.f32 %v462, %v745
        %v747 = vpop.f32.mrb[0].mxu0
        %748 = vmatprep.mubr.f32.mxu0 0.0
        %749 = vmatmul.mubr.f32.gmra.mrb[0].mxu0 %v421
        %v750 = vpop.f32.mrb[0].mxu0
        %v751 = vadd.f32 %v462, %v750
        %v752 = vpop.f32.mrb[0].mxu0
        %753 = vmatprep.mubr.f32.mxu0 0.0
        %754 = vmatmul.mubr.f32.gmra.mrb[0].mxu0 %v422
        %v755 = vpop.f32.mrb[0].mxu0
        %v756 = vadd.f32 %v462, %v755
        %v757 = vpop.f32.mrb[0].mxu0
        %758 = vmatprep.mubr.f32.mxu0 0.0
        %759 = vmatmul.mubr.f32.gmra.mrb[0].mxu0 %v423
        %v760 = vpop.f32.mrb[0].mxu0
        %v761 = vadd.f32 %v462, %v760
        %v762 = vpop.f32.mrb[0].mxu0
        %763 = vmatprep.mubr.f32.mxu0 0.0
        %764 = vmatmul.mubr.f32.gmra.mrb[0].mxu0 %v424
        %v765 = vpop.f32.mrb[0].mxu0
        %v766 = vadd.f32 %v462, %v765
        %v767 = vpop.f32.mrb[0].mxu0
        %768 = vmatprep.mubr.f32.mxu0 0.0
        %769 = vmatmul.mubr.f32.gmra.mrb[0].mxu0 %v425
        %v770 = vpop.f32.mrb[0].mxu0
        %v771 = vadd.f32 %v462, %v770
        %v772 = vpop.f32.mrb[0].mxu0
        %773 = vmatprep.mubr.f32.mxu0 0.0
        %774 = vmatmul.mubr.f32.gmra.mrb[0].mxu0 %v426
        %v775 = vpop.f32.mrb[0].mxu0
        %v776 = vadd.f32 %v462, %v775
        %v777 = vpop.f32.mrb[0].mxu0
        %778 = vmatprep.mubr.f32.mxu0 0.0
        %779 = vmatmul.mubr.f32.gmra.mrb[0].mxu0 %v427
        %v780 = vpop.f32.mrb[0].mxu0
        %v781 = vadd.f32 %v462, %v780
        %v782 = vpop.f32.mrb[0].mxu0
        %783 = vmatprep.mubr.f32.mxu0 0.0
        %784 = vmatmul.mubr.f32.gmra.mrb[0].mxu0 %v428
        %v785 = vpop.f32.mrb[0].mxu0
        %v786 = vadd.f32 %v462, %v785
        %v787 = vpop.f32.mrb[0].mxu0
        %788 = vmatprep.mubr.f32.mxu0 0.0
        %789 = vmatmul.mubr.f32.gmra.mrb[0].mxu0 %v429
        %v790 = vpop.f32.mrb[0].mxu0
        %v791 = vadd.f32 %v462, %v790
        %v792 = vpop.f32.mrb[0].mxu0
        %793 = vmatprep.mubr.f32.mxu0 0.0
        %794 = vmatmul.mubr.f32.gmra.mrb[0].mxu0 %v430
        %v795 = vpop.f32.mrb[0].mxu0
        %v796 = vadd.f32 %v462, %v795
        %v797 = vpop.f32.mrb[0].mxu0
        %798 = vmatprep.mubr.f32.mxu0 0.0
        %799 = vmatmul.mubr.f32.gmra.mrb[0].mxu0 %v431
        %v800 = vpop.f32.mrb[0].mxu0
        %v801 = vadd.f32 %v462, %v800
        %v802 = vpop.f32.mrb[0].mxu0
        %803 = vmatprep.mubr.f32.mxu0 0.0
        %804 = vmatmul.mubr.f32.gmra.mrb[0].mxu0 %v432
        %v805 = vpop.f32.mrb[0].mxu0
        %v806 = vadd.f32 %v462, %v805
        %v807 = vpop.f32.mrb[0].mxu0
        %808 = vmatprep.mubr.f32.mxu0 0.0
        %809 = vmatmul.mubr.f32.gmra.mrb[0].mxu0 %v433
        %v810 = vpop.f32.mrb[0].mxu0
        %v811 = vadd.f32 %v462, %v810
        %v812 = vpop.f32.mrb[0].mxu0
        %813 = vmatprep.mubr.f32.mxu0 0.0
        %814 = vmatmul.mubr.f32.gmra.mrb[0].mxu0 %v434
        %v815 = vpop.f32.mrb[0].mxu0
        %v816 = vadd.f32 %v462, %v815
        %v817 = vpop.f32.mrb[0].mxu0
        %818 = vmatprep.mubr.f32.mxu0 0.0
        %819 = vmatmul.mubr.f32.gmra.mrb[0].mxu0 %v435
        %v820 = vpop.f32.mrb[0].mxu0
        %v821 = vadd.f32 %v462, %v820
        %v822 = vpop.f32.mrb[0].mxu0
        %823 = vmatprep.mubr.f32.mxu0 0.0
        %824 = vmatmul.mubr.f32.gmra.mrb[0].mxu0 %v436
        %v825 = vpop.f32.mrb[0].mxu0
        %v826 = vadd.f32 %v462, %v825
        %v827 = vpop.f32.mrb[0].mxu0
        %828 = vmatprep.mubr.f32.mxu0 0.0
        %829 = vmatmul.mubr.f32.gmra.mrb[0].mxu0 %v437
        %v830 = vpop.f32.mrb[0].mxu0
        %v831 = vadd.f32 %v462, %v830
        %v832 = vpop.f32.mrb[0].mxu0
        %833 = vmatprep.mubr.f32.mxu0 0.0
        %834 = vmatmul.mubr.f32.gmra.mrb[0].mxu0 %v438
        %v835 = vpop.f32.mrb[0].mxu0
        %v836 = vadd.f32 %v462, %v835
        %v837 = vpop.f32.mrb[0].mxu0
        %838 = vmatprep.mubr.f32.mxu0 0.0
        %839 = vmatmul.mubr.f32.gmra.mrb[0].mxu0 %v439
        %v840 = vpop.f32.mrb[0].mxu0
        %v841 = vadd.f32 %v462, %v840
        %v842 = vpop.f32.mrb[0].mxu0
        %843 = vmatprep.mubr.f32.mxu0 0.0
        %844 = vmatmul.mubr.f32.gmra.mrb[0].mxu0 %v440
        %v845 = vpop.f32.mrb[0].mxu0
        %v846 = vadd.f32 %v462, %v845
        %v847 = vpop.f32.mrb[0].mxu0
        %848 = vdwg.mxu0
        %v849 = vld [vmem:[%s328] sm:$0xff]
        %v850 = vld [vmem:[%s328 + $0x8] sm:$0xff]
        %v851 = vld [vmem:[%s328 + $0x10] sm:$0xff]
        %v852 = vld [vmem:[%s328 + $0x18] sm:$0xff]
        %v853 = vld [vmem:[%s328 + $0x20] sm:$0xff]
        %v854 = vld [vmem:[%s328 + $0x28] sm:$0xff]
        %v855 = vld [vmem:[%s328 + $0x30] sm:$0xff]
        %v856 = vld [vmem:[%s328 + $0x38] sm:$0xff]
        %v857 = vld [vmem:[%s328 + $0x40] sm:$0xff]
        %v858 = vld [vmem:[%s328 + $0x48] sm:$0xff]
        %v859 = vld [vmem:[%s328 + $0x50] sm:$0xff]
        %v860 = vld [vmem:[%s328 + $0x58] sm:$0xff]
        %v861 = vld [vmem:[%s328 + $0x60] sm:$0xff]
        %v862 = vld [vmem:[%s328 + $0x68] sm:$0xff]
        %v863 = vld [vmem:[%s328 + $0x70] sm:$0xff]
        %v864 = vld [vmem:[%s328 + $0x78] sm:$0xff]
        %v865 = vld [vmem:[%s328 + $0x80] sm:$0xff]
        %v866 = vld [vmem:[%s328 + $0x88] sm:$0xff]
        %v867 = vld [vmem:[%s328 + $0x90] sm:$0xff]
        %v868 = vld [vmem:[%s328 + $0x98] sm:$0xff]
        %v869 = vld [vmem:[%s328 + $0xa0] sm:$0xff]
        %v870 = vld [vmem:[%s328 + $0xa8] sm:$0xff]
        %v871 = vld [vmem:[%s328 + $0xb0] sm:$0xff]
        %v872 = vld [vmem:[%s328 + $0xb8] sm:$0xff]
        %v873 = vld [vmem:[%s328 + $0xc0] sm:$0xff]
        %v874 = vld [vmem:[%s328 + $0xc8] sm:$0xff]
        %v875 = vld [vmem:[%s328 + $0xd0] sm:$0xff]
        %v876 = vld [vmem:[%s328 + $0xd8] sm:$0xff]
        %v877 = vld [vmem:[%s328 + $0xe0] sm:$0xff]
        %v878 = vld [vmem:[%s328 + $0xe8] sm:$0xff]
        %v879 = vld [vmem:[%s328 + $0xf0] sm:$0xff]
        %v880 = vld [vmem:[%s328 + $0xf8] sm:$0xff]
        %v881 = vld [vmem:[#allocation8] sm:$0xff]
        %v882 = vld [vmem:[#allocation8 + $0x8] sm:$0xff]
        %v883 = vld [vmem:[#allocation8 + $0x10] sm:$0xff]
        %v884 = vld [vmem:[#allocation8 + $0x18] sm:$0xff]
        %v885 = vld [vmem:[#allocation8 + $0x20] sm:$0xff]
        %v886 = vld [vmem:[#allocation8 + $0x28] sm:$0xff]
        %v887 = vld [vmem:[#allocation8 + $0x30] sm:$0xff]
        %v888 = vld [vmem:[#allocation8 + $0x38] sm:$0xff]
        %v889 = vld [vmem:[#allocation8 + $0x40] sm:$0xff]
        %v890 = vld [vmem:[#allocation8 + $0x48] sm:$0xff]
        %v891 = vld [vmem:[#allocation8 + $0x50] sm:$0xff]
        %v892 = vld [vmem:[#allocation8 + $0x58] sm:$0xff]
        %v893 = vld [vmem:[#allocation8 + $0x60] sm:$0xff]
        %v894 = vld [vmem:[#allocation8 + $0x68] sm:$0xff]
        %v895 = vld [vmem:[#allocation8 + $0x70] sm:$0xff]
        %v896 = vld [vmem:[#allocation8 + $0x78] sm:$0xff]
        %v897 = vld [vmem:[#allocation8 + $0x80] sm:$0xff]
        %v898 = vld [vmem:[#allocation8 + $0x88] sm:$0xff]
        %v899 = vld [vmem:[#allocation8 + $0x90] sm:$0xff]
        %v900 = vld [vmem:[#allocation8 + $0x98] sm:$0xff]
        %v901 = vld [vmem:[#allocation8 + $0xa0] sm:$0xff]
        %v902 = vld [vmem:[#allocation8 + $0xa8] sm:$0xff]
        %v903 = vld [vmem:[#allocation8 + $0xb0] sm:$0xff]
        %v904 = vld [vmem:[#allocation8 + $0xb8] sm:$0xff]
        %v905 = vld [vmem:[#allocation8 + $0xc0] sm:$0xff]
        %v906 = vld [vmem:[#allocation8 + $0xc8] sm:$0xff]
        %v907 = vld [vmem:[#allocation8 + $0xd0] sm:$0xff]
        %v908 = vld [vmem:[#allocation8 + $0xd8] sm:$0xff]
        %v909 = vld [vmem:[#allocation8 + $0xe0] sm:$0xff]
        %v910 = vld [vmem:[#allocation8 + $0xe8] sm:$0xff]
        %v911 = vld [vmem:[#allocation8 + $0xf0] sm:$0xff]
        %v912 = vld [vmem:[#allocation8 + $0xf8] sm:$0xff]
        %v913 = vld [vmem:[%s5] sm:$0x3]
        %v915 = vlaneseq
        %v916 = vshrl.u32 %v915, 7
        %v917 = vsub.s32 0, %v916
        %v918 = vrot.slane %v913, %v917
        %v919 = vlaneseq
        %v920 = vshrl.u32 %v919, 7
        %v921 = vsub.s32 1, %v920
        %v922 = vrot.slane %v913, %v921
        %925 = vmatprep.subr.mxu0 %v882
        %926 = vmatpush1.msra.mxu0 %v881
        %927 = vmatprep.subr.mxu0 %v884
        %928 = vmatpush1.msra.mxu0 %v883
        %929 = vmatprep.subr.mxu0 %v886
        %930 = vmatpush1.msra.mxu0 %v885
        %931 = vmatprep.subr.mxu0 %v888
        %932 = vmatpush1.msra.mxu0 %v887
        %933 = vmatprep.subr.mxu0 %v890
        %934 = vmatpush1.msra.mxu0 %v889
        %935 = vmatprep.subr.mxu0 %v892
        %936 = vmatpush1.msra.mxu0 %v891
        %937 = vmatprep.subr.mxu0 %v894
        %938 = vmatpush1.msra.mxu0 %v893
        %939 = vmatprep.subr.mxu0 %v896
        %940 = vmatpush1.msra.mxu0 %v895
        %941 = vmatprep.subr.mxu0 %v898
        %942 = vmatpush1.msra.mxu0 %v897
        %943 = vmatprep.subr.mxu0 %v900
        %944 = vmatpush1.msra.mxu0 %v899
        %945 = vmatprep.subr.mxu0 %v902
        %946 = vmatpush1.msra.mxu0 %v901
        %947 = vmatprep.subr.mxu0 %v904
        %948 = vmatpush1.msra.mxu0 %v903
        %949 = vmatprep.subr.mxu0 %v906
        %950 = vmatpush1.msra.mxu0 %v905
        %951 = vmatprep.subr.mxu0 %v908
        %952 = vmatpush1.msra.mxu0 %v907
        %953 = vmatprep.subr.mxu0 %v910
        %954 = vmatpush1.msra.mxu0 %v909
        %955 = vmatprep.subr.mxu0 %v912
        %956 = vmatpush1.msra.mxu0 %v911
        %957 = vmatprep.subr.mxu0 0.0
        %958 = vmatpush1.msra.mxu0 0.0
        %959 = vmatprep.subr.mxu0 0.0
        %960 = vmatpush1.msra.mxu0 0.0
        %961 = vmatprep.subr.mxu0 0.0
        %962 = vmatpush1.msra.mxu0 0.0
        %963 = vmatprep.subr.mxu0 0.0
        %964 = vmatpush1.msra.mxu0 0.0
        %965 = vmatprep.subr.mxu0 0.0
        %966 = vmatpush1.msra.mxu0 0.0
        %967 = vmatprep.subr.mxu0 0.0
        %968 = vmatpush1.msra.mxu0 0.0
        %969 = vmatprep.subr.mxu0 0.0
        %970 = vmatpush1.msra.mxu0 0.0
        %971 = vmatprep.subr.mxu0 0.0
        %972 = vmatpush1.msra.mxu0 0.0
        %973 = vmatprep.subr.mxu0 0.0
        %974 = vmatpush1.msra.mxu0 0.0
        %975 = vmatprep.subr.mxu0 0.0
        %976 = vmatpush1.msra.mxu0 0.0
        %977 = vmatprep.subr.mxu0 0.0
        %978 = vmatpush1.msra.mxu0 0.0
        %979 = vmatprep.subr.mxu0 0.0
        %980 = vmatpush1.msra.mxu0 0.0
        %981 = vmatprep.subr.mxu0 0.0
        %982 = vmatpush1.msra.mxu0 0.0
        %983 = vmatprep.subr.mxu0 0.0
        %984 = vmatpush1.msra.mxu0 0.0
        %985 = vmatprep.subr.mxu0 0.0
        %986 = vmatpush1.msra.mxu0 0.0
        %987 = vmatprep.subr.mxu0 0.0
        %988 = vmatpush1.msra.mxu0 0.0
        %989 = vmatprep.mubr.f32.mxu0 0.0
        %990 = vmatmul.mubr.f32.gmra.mrb[0].mxu0 %v849
        %v991 = vpop.f32.mrb[0].mxu0
        %v992 = vadd.f32 %v918, %v991
        %v993 = vpop.f32.mrb[0].mxu0
        %v994 = vadd.f32 %v922, %v993
        %995 = vmatprep.mubr.f32.mxu0 0.0
        %996 = vmatmul.mubr.f32.gmra.mrb[0].mxu0 %v850
        %v997 = vpop.f32.mrb[0].mxu0
        %v998 = vadd.f32 %v918, %v997
        %v999 = vpop.f32.mrb[0].mxu0
        %v1000 = vadd.f32 %v922, %v999
        %1001 = vmatprep.mubr.f32.mxu0 0.0
        %1002 = vmatmul.mubr.f32.gmra.mrb[0].mxu0 %v851
        %v1003 = vpop.f32.mrb[0].mxu0
        %v1004 = vadd.f32 %v918, %v1003
        %v1005 = vpop.f32.mrb[0].mxu0
        %v1006 = vadd.f32 %v922, %v1005
        %1007 = vmatprep.mubr.f32.mxu0 0.0
        %1008 = vmatmul.mubr.f32.gmra.mrb[0].mxu0 %v852
        %v1009 = vpop.f32.mrb[0].mxu0
        %v1010 = vadd.f32 %v918, %v1009
        %v1011 = vpop.f32.mrb[0].mxu0
        %v1012 = vadd.f32 %v922, %v1011
        %1013 = vmatprep.mubr.f32.mxu0 0.0
        %1014 = vmatmul.mubr.f32.gmra.mrb[0].mxu0 %v853
        %v1015 = vpop.f32.mrb[0].mxu0
        %v1016 = vadd.f32 %v918, %v1015
        %v1017 = vpop.f32.mrb[0].mxu0
        %v1018 = vadd.f32 %v922, %v1017
        %1019 = vmatprep.mubr.f32.mxu0 0.0
        %1020 = vmatmul.mubr.f32.gmra.mrb[0].mxu0 %v854
        %v1021 = vpop.f32.mrb[0].mxu0
        %v1022 = vadd.f32 %v918, %v1021
        %v1023 = vpop.f32.mrb[0].mxu0
        %v1024 = vadd.f32 %v922, %v1023
        %1025 = vmatprep.mubr.f32.mxu0 0.0
        %1026 = vmatmul.mubr.f32.gmra.mrb[0].mxu0 %v855
        %v1027 = vpop.f32.mrb[0].mxu0
        %v1028 = vadd.f32 %v918, %v1027
        %v1029 = vpop.f32.mrb[0].mxu0
        %v1030 = vadd.f32 %v922, %v1029
        %1031 = vmatprep.mubr.f32.mxu0 0.0
        %1032 = vmatmul.mubr.f32.gmra.mrb[0].mxu0 %v856
        %v1033 = vpop.f32.mrb[0].mxu0
        %v1034 = vadd.f32 %v918, %v1033
        %v1035 = vpop.f32.mrb[0].mxu0
        %v1036 = vadd.f32 %v922, %v1035
        %1037 = vmatprep.mubr.f32.mxu0 0.0
        %1038 = vmatmul.mubr.f32.gmra.mrb[0].mxu0 %v857
        %v1039 = vpop.f32.mrb[0].mxu0
        %v1040 = vadd.f32 %v918, %v1039
        %v1041 = vpop.f32.mrb[0].mxu0
        %v1042 = vadd.f32 %v922, %v1041
        %1043 = vmatprep.mubr.f32.mxu0 0.0
        %1044 = vmatmul.mubr.f32.gmra.mrb[0].mxu0 %v858
        %v1045 = vpop.f32.mrb[0].mxu0
        %v1046 = vadd.f32 %v918, %v1045
        %v1047 = vpop.f32.mrb[0].mxu0
        %v1048 = vadd.f32 %v922, %v1047
        %1049 = vmatprep.mubr.f32.mxu0 0.0
        %1050 = vmatmul.mubr.f32.gmra.mrb[0].mxu0 %v859
        %v1051 = vpop.f32.mrb[0].mxu0
        %v1052 = vadd.f32 %v918, %v1051
        %v1053 = vpop.f32.mrb[0].mxu0
        %v1054 = vadd.f32 %v922, %v1053
        %1055 = vmatprep.mubr.f32.mxu0 0.0
        %1056 = vmatmul.mubr.f32.gmra.mrb[0].mxu0 %v860
        %v1057 = vpop.f32.mrb[0].mxu0
        %v1058 = vadd.f32 %v918, %v1057
        %v1059 = vpop.f32.mrb[0].mxu0
        %v1060 = vadd.f32 %v922, %v1059
        %1061 = vmatprep.mubr.f32.mxu0 0.0
        %1062 = vmatmul.mubr.f32.gmra.mrb[0].mxu0 %v861
        %v1063 = vpop.f32.mrb[0].mxu0
        %v1064 = vadd.f32 %v918, %v1063
        %v1065 = vpop.f32.mrb[0].mxu0
        %v1066 = vadd.f32 %v922, %v1065
        %1067 = vmatprep.mubr.f32.mxu0 0.0
        %1068 = vmatmul.mubr.f32.gmra.mrb[0].mxu0 %v862
        %v1069 = vpop.f32.mrb[0].mxu0
        %v1070 = vadd.f32 %v918, %v1069
        %v1071 = vpop.f32.mrb[0].mxu0
        %v1072 = vadd.f32 %v922, %v1071
        %1073 = vmatprep.mubr.f32.mxu0 0.0
        %1074 = vmatmul.mubr.f32.gmra.mrb[0].mxu0 %v863
        %v1075 = vpop.f32.mrb[0].mxu0
        %v1076 = vadd.f32 %v918, %v1075
        %v1077 = vpop.f32.mrb[0].mxu0
        %v1078 = vadd.f32 %v922, %v1077
        %1079 = vmatprep.mubr.f32.mxu0 0.0
        %1080 = vmatmul.mubr.f32.gmra.mrb[0].mxu0 %v864
        %v1081 = vpop.f32.mrb[0].mxu0
        %v1082 = vadd.f32 %v918, %v1081
        %v1083 = vpop.f32.mrb[0].mxu0
        %v1084 = vadd.f32 %v922, %v1083
        %1085 = vmatprep.mubr.f32.mxu0 0.0
        %1086 = vmatmul.mubr.f32.gmra.mrb[0].mxu0 %v865
        %v1087 = vpop.f32.mrb[0].mxu0
        %v1088 = vadd.f32 %v918, %v1087
        %v1089 = vpop.f32.mrb[0].mxu0
        %v1090 = vadd.f32 %v922, %v1089
        %1091 = vmatprep.mubr.f32.mxu0 0.0
        %1092 = vmatmul.mubr.f32.gmra.mrb[0].mxu0 %v866
        %v1093 = vpop.f32.mrb[0].mxu0
        %v1094 = vadd.f32 %v918, %v1093
        %v1095 = vpop.f32.mrb[0].mxu0
        %v1096 = vadd.f32 %v922, %v1095
        %1097 = vmatprep.mubr.f32.mxu0 0.0
        %1098 = vmatmul.mubr.f32.gmra.mrb[0].mxu0 %v867
        %v1099 = vpop.f32.mrb[0].mxu0
        %v1100 = vadd.f32 %v918, %v1099
        %v1101 = vpop.f32.mrb[0].mxu0
        %v1102 = vadd.f32 %v922, %v1101
        %1103 = vmatprep.mubr.f32.mxu0 0.0
        %1104 = vmatmul.mubr.f32.gmra.mrb[0].mxu0 %v868
        %v1105 = vpop.f32.mrb[0].mxu0
        %v1106 = vadd.f32 %v918, %v1105
        %v1107 = vpop.f32.mrb[0].mxu0
        %v1108 = vadd.f32 %v922, %v1107
        %1109 = vmatprep.mubr.f32.mxu0 0.0
        %1110 = vmatmul.mubr.f32.gmra.mrb[0].mxu0 %v869
        %v1111 = vpop.f32.mrb[0].mxu0
        %v1112 = vadd.f32 %v918, %v1111
        %v1113 = vpop.f32.mrb[0].mxu0
        %v1114 = vadd.f32 %v922, %v1113
        %1115 = vmatprep.mubr.f32.mxu0 0.0
        %1116 = vmatmul.mubr.f32.gmra.mrb[0].mxu0 %v870
        %v1117 = vpop.f32.mrb[0].mxu0
        %v1118 = vadd.f32 %v918, %v1117
        %v1119 = vpop.f32.mrb[0].mxu0
        %v1120 = vadd.f32 %v922, %v1119
        %1121 = vmatprep.mubr.f32.mxu0 0.0
        %1122 = vmatmul.mubr.f32.gmra.mrb[0].mxu0 %v871
        %v1123 = vpop.f32.mrb[0].mxu0
        %v1124 = vadd.f32 %v918, %v1123
        %v1125 = vpop.f32.mrb[0].mxu0
        %v1126 = vadd.f32 %v922, %v1125
        %1127 = vmatprep.mubr.f32.mxu0 0.0
        %1128 = vmatmul.mubr.f32.gmra.mrb[0].mxu0 %v872
        %v1129 = vpop.f32.mrb[0].mxu0
        %v1130 = vadd.f32 %v918, %v1129
        %v1131 = vpop.f32.mrb[0].mxu0
        %v1132 = vadd.f32 %v922, %v1131
        %1133 = vmatprep.mubr.f32.mxu0 0.0
        %1134 = vmatmul.mubr.f32.gmra.mrb[0].mxu0 %v873
        %v1135 = vpop.f32.mrb[0].mxu0
        %v1136 = vadd.f32 %v918, %v1135
        %v1137 = vpop.f32.mrb[0].mxu0
        %v1138 = vadd.f32 %v922, %v1137
        %1139 = vmatprep.mubr.f32.mxu0 0.0
        %1140 = vmatmul.mubr.f32.gmra.mrb[0].mxu0 %v874
        %v1141 = vpop.f32.mrb[0].mxu0
        %v1142 = vadd.f32 %v918, %v1141
        %v1143 = vpop.f32.mrb[0].mxu0
        %v1144 = vadd.f32 %v922, %v1143
        %1145 = vmatprep.mubr.f32.mxu0 0.0
        %1146 = vmatmul.mubr.f32.gmra.mrb[0].mxu0 %v875
        %v1147 = vpop.f32.mrb[0].mxu0
        %v1148 = vadd.f32 %v918, %v1147
        %v1149 = vpop.f32.mrb[0].mxu0
        %v1150 = vadd.f32 %v922, %v1149
        %1151 = vmatprep.mubr.f32.mxu0 0.0
        %1152 = vmatmul.mubr.f32.gmra.mrb[0].mxu0 %v876
        %v1153 = vpop.f32.mrb[0].mxu0
        %v1154 = vadd.f32 %v918, %v1153
        %v1155 = vpop.f32.mrb[0].mxu0
        %v1156 = vadd.f32 %v922, %v1155
        %1157 = vmatprep.mubr.f32.mxu0 0.0
        %1158 = vmatmul.mubr.f32.gmra.mrb[0].mxu0 %v877
        %v1159 = vpop.f32.mrb[0].mxu0
        %v1160 = vadd.f32 %v918, %v1159
        %v1161 = vpop.f32.mrb[0].mxu0
        %v1162 = vadd.f32 %v922, %v1161
        %1163 = vmatprep.mubr.f32.mxu0 0.0
        %1164 = vmatmul.mubr.f32.gmra.mrb[0].mxu0 %v878
        %v1165 = vpop.f32.mrb[0].mxu0
        %v1166 = vadd.f32 %v918, %v1165
        %v1167 = vpop.f32.mrb[0].mxu0
        %v1168 = vadd.f32 %v922, %v1167
        %1169 = vmatprep.mubr.f32.mxu0 0.0
        %1170 = vmatmul.mubr.f32.gmra.mrb[0].mxu0 %v879
        %v1171 = vpop.f32.mrb[0].mxu0
        %v1172 = vadd.f32 %v918, %v1171
        %v1173 = vpop.f32.mrb[0].mxu0
        %v1174 = vadd.f32 %v922, %v1173
        %1175 = vmatprep.mubr.f32.mxu0 0.0
        %1176 = vmatmul.mubr.f32.gmra.mrb[0].mxu0 %v880
        %v1177 = vpop.f32.mrb[0].mxu0
        %v1178 = vadd.f32 %v918, %v1177
        %v1179 = vpop.f32.mrb[0].mxu0
        %v1180 = vadd.f32 %v922, %v1179
        %1181 = vdwg.mxu0
        %1182 = vst [vmem:[%s369] sm:$0xff] %v531
        %1183 = vst [vmem:[%s369 + $0x8] sm:$0xff] %v536
        %1184 = vst [vmem:[%s369 + $0x10] sm:$0xff] %v541
        %1185 = vst [vmem:[%s369 + $0x18] sm:$0xff] %v546
        %1186 = vst [vmem:[%s369 + $0x20] sm:$0xff] %v551
        %1187 = vst [vmem:[%s369 + $0x28] sm:$0xff] %v556
        %1188 = vst [vmem:[%s369 + $0x30] sm:$0xff] %v561
        %1189 = vst [vmem:[%s369 + $0x38] sm:$0xff] %v566
        %1190 = vst [vmem:[%s369 + $0x40] sm:$0xff] %v571
        %1191 = vst [vmem:[%s369 + $0x48] sm:$0xff] %v576
        %1192 = vst [vmem:[%s369 + $0x50] sm:$0xff] %v581
        %1193 = vst [vmem:[%s369 + $0x58] sm:$0xff] %v586
        %1194 = vst [vmem:[%s369 + $0x60] sm:$0xff] %v591
        %1195 = vst [vmem:[%s369 + $0x68] sm:$0xff] %v596
        %1196 = vst [vmem:[%s369 + $0x70] sm:$0xff] %v601
        %1197 = vst [vmem:[%s369 + $0x78] sm:$0xff] %v606
        %1198 = vst [vmem:[%s369 + $0x80] sm:$0xff] %v611
        %1199 = vst [vmem:[%s369 + $0x88] sm:$0xff] %v616
        %1200 = vst [vmem:[%s369 + $0x90] sm:$0xff] %v621
        %1201 = vst [vmem:[%s369 + $0x98] sm:$0xff] %v626
        %1202 = vst [vmem:[%s369 + $0xa0] sm:$0xff] %v631
        %1203 = vst [vmem:[%s369 + $0xa8] sm:$0xff] %v636
        %1204 = vst [vmem:[%s369 + $0xb0] sm:$0xff] %v641
        %1205 = vst [vmem:[%s369 + $0xb8] sm:$0xff] %v646
        %1206 = vst [vmem:[%s369 + $0xc0] sm:$0xff] %v651
        %1207 = vst [vmem:[%s369 + $0xc8] sm:$0xff] %v656
        %1208 = vst [vmem:[%s369 + $0xd0] sm:$0xff] %v661
        %1209 = vst [vmem:[%s369 + $0xd8] sm:$0xff] %v666
        %1210 = vst [vmem:[%s369 + $0xe0] sm:$0xff] %v671
        %1211 = vst [vmem:[%s369 + $0xe8] sm:$0xff] %v676
        %1212 = vst [vmem:[%s369 + $0xf0] sm:$0xff] %v681
        %1213 = vst [vmem:[%s369 + $0xf8] sm:$0xff] %v686
        %1214 = vst [vmem:[%s369 + $0x100] sm:$0xff] %v691
        %1215 = vst [vmem:[%s369 + $0x108] sm:$0xff] %v696
        %1216 = vst [vmem:[%s369 + $0x110] sm:$0xff] %v701
        %1217 = vst [vmem:[%s369 + $0x118] sm:$0xff] %v706
        %1218 = vst [vmem:[%s369 + $0x120] sm:$0xff] %v711
        %1219 = vst [vmem:[%s369 + $0x128] sm:$0xff] %v716
        %1220 = vst [vmem:[%s369 + $0x130] sm:$0xff] %v721
        %1221 = vst [vmem:[%s369 + $0x138] sm:$0xff] %v726
        %1222 = vst [vmem:[%s369 + $0x140] sm:$0xff] %v731
        %1223 = vst [vmem:[%s369 + $0x148] sm:$0xff] %v736
        %1224 = vst [vmem:[%s369 + $0x150] sm:$0xff] %v741
        %1225 = vst [vmem:[%s369 + $0x158] sm:$0xff] %v746
        %1226 = vst [vmem:[%s369 + $0x160] sm:$0xff] %v751
        %1227 = vst [vmem:[%s369 + $0x168] sm:$0xff] %v756
        %1228 = vst [vmem:[%s369 + $0x170] sm:$0xff] %v761
        %1229 = vst [vmem:[%s369 + $0x178] sm:$0xff] %v766
        %1230 = vst [vmem:[%s369 + $0x180] sm:$0xff] %v771
        %1231 = vst [vmem:[%s369 + $0x188] sm:$0xff] %v776
        %1232 = vst [vmem:[%s369 + $0x190] sm:$0xff] %v781
        %1233 = vst [vmem:[%s369 + $0x198] sm:$0xff] %v786
        %1234 = vst [vmem:[%s369 + $0x1a0] sm:$0xff] %v791
        %1235 = vst [vmem:[%s369 + $0x1a8] sm:$0xff] %v796
        %1236 = vst [vmem:[%s369 + $0x1b0] sm:$0xff] %v801
        %1237 = vst [vmem:[%s369 + $0x1b8] sm:$0xff] %v806
        %1238 = vst [vmem:[%s369 + $0x1c0] sm:$0xff] %v811
        %1239 = vst [vmem:[%s369 + $0x1c8] sm:$0xff] %v816
        %1240 = vst [vmem:[%s369 + $0x1d0] sm:$0xff] %v821
        %1241 = vst [vmem:[%s369 + $0x1d8] sm:$0xff] %v826
        %1242 = vst [vmem:[%s369 + $0x1e0] sm:$0xff] %v831
        %1243 = vst [vmem:[%s369 + $0x1e8] sm:$0xff] %v836
        %1244 = vst [vmem:[%s369 + $0x1f0] sm:$0xff] %v841
        %1245 = vst [vmem:[%s369 + $0x1f8] sm:$0xff] %v846
        %1246 = vst [vmem:[%s376] sm:$0xff] %v992
        %1247 = vst [vmem:[%s376 + $0x8] sm:$0xff] %v994
        %1248 = vst [vmem:[%s376 + $0x10] sm:$0xff] %v998
        %1249 = vst [vmem:[%s376 + $0x18] sm:$0xff] %v1000
        %1250 = vst [vmem:[%s376 + $0x20] sm:$0xff] %v1004
        %1251 = vst [vmem:[%s376 + $0x28] sm:$0xff] %v1006
        %1252 = vst [vmem:[%s376 + $0x30] sm:$0xff] %v1010
        %1253 = vst [vmem:[%s376 + $0x38] sm:$0xff] %v1012
        %1254 = vst [vmem:[%s376 + $0x40] sm:$0xff] %v1016
        %1255 = vst [vmem:[%s376 + $0x48] sm:$0xff] %v1018
        %1256 = vst [vmem:[%s376 + $0x50] sm:$0xff] %v1022
        %1257 = vst [vmem:[%s376 + $0x58] sm:$0xff] %v1024
        %1258 = vst [vmem:[%s376 + $0x60] sm:$0xff] %v1028
        %1259 = vst [vmem:[%s376 + $0x68] sm:$0xff] %v1030
        %1260 = vst [vmem:[%s376 + $0x70] sm:$0xff] %v1034
        %1261 = vst [vmem:[%s376 + $0x78] sm:$0xff] %v1036
        %1262 = vst [vmem:[%s376 + $0x80] sm:$0xff] %v1040
        %1263 = vst [vmem:[%s376 + $0x88] sm:$0xff] %v1042
        %1264 = vst [vmem:[%s376 + $0x90] sm:$0xff] %v1046
        %1265 = vst [vmem:[%s376 + $0x98] sm:$0xff] %v1048
        %1266 = vst [vmem:[%s376 + $0xa0] sm:$0xff] %v1052
        %1267 = vst [vmem:[%s376 + $0xa8] sm:$0xff] %v1054
        %1268 = vst [vmem:[%s376 + $0xb0] sm:$0xff] %v1058
        %1269 = vst [vmem:[%s376 + $0xb8] sm:$0xff] %v1060
        %1270 = vst [vmem:[%s376 + $0xc0] sm:$0xff] %v1064
        %1271 = vst [vmem:[%s376 + $0xc8] sm:$0xff] %v1066
        %1272 = vst [vmem:[%s376 + $0xd0] sm:$0xff] %v1070
        %1273 = vst [vmem:[%s376 + $0xd8] sm:$0xff] %v1072
        %1274 = vst [vmem:[%s376 + $0xe0] sm:$0xff] %v1076
        %1275 = vst [vmem:[%s376 + $0xe8] sm:$0xff] %v1078
        %1276 = vst [vmem:[%s376 + $0xf0] sm:$0xff] %v1082
        %1277 = vst [vmem:[%s376 + $0xf8] sm:$0xff] %v1084
        %1278 = vst [vmem:[%s376 + $0x100] sm:$0xff] %v1088
        %1279 = vst [vmem:[%s376 + $0x108] sm:$0xff] %v1090
        %1280 = vst [vmem:[%s376 + $0x110] sm:$0xff] %v1094
        %1281 = vst [vmem:[%s376 + $0x118] sm:$0xff] %v1096
        %1282 = vst [vmem:[%s376 + $0x120] sm:$0xff] %v1100
        %1283 = vst [vmem:[%s376 + $0x128] sm:$0xff] %v1102
        %1284 = vst [vmem:[%s376 + $0x130] sm:$0xff] %v1106
        %1285 = vst [vmem:[%s376 + $0x138] sm:$0xff] %v1108
        %1286 = vst [vmem:[%s376 + $0x140] sm:$0xff] %v1112
        %1287 = vst [vmem:[%s376 + $0x148] sm:$0xff] %v1114
        %1288 = vst [vmem:[%s376 + $0x150] sm:$0xff] %v1118
        %1289 = vst [vmem:[%s376 + $0x158] sm:$0xff] %v1120
        %1290 = vst [vmem:[%s376 + $0x160] sm:$0xff] %v1124
        %1291 = vst [vmem:[%s376 + $0x168] sm:$0xff] %v1126
        %1292 = vst [vmem:[%s376 + $0x170] sm:$0xff] %v1130
        %1293 = vst [vmem:[%s376 + $0x178] sm:$0xff] %v1132
        %1294 = vst [vmem:[%s376 + $0x180] sm:$0xff] %v1136
        %1295 = vst [vmem:[%s376 + $0x188] sm:$0xff] %v1138
        %1296 = vst [vmem:[%s376 + $0x190] sm:$0xff] %v1142
        %1297 = vst [vmem:[%s376 + $0x198] sm:$0xff] %v1144
        %1298 = vst [vmem:[%s376 + $0x1a0] sm:$0xff] %v1148
        %1299 = vst [vmem:[%s376 + $0x1a8] sm:$0xff] %v1150
        %1300 = vst [vmem:[%s376 + $0x1b0] sm:$0xff] %v1154
        %1301 = vst [vmem:[%s376 + $0x1b8] sm:$0xff] %v1156
        %1302 = vst [vmem:[%s376 + $0x1c0] sm:$0xff] %v1160
        %1303 = vst [vmem:[%s376 + $0x1c8] sm:$0xff] %v1162
        %1304 = vst [vmem:[%s376 + $0x1d0] sm:$0xff] %v1166
        %1305 = vst [vmem:[%s376 + $0x1d8] sm:$0xff] %v1168
        %1306 = vst [vmem:[%s376 + $0x1e0] sm:$0xff] %v1172
        %1307 = vst [vmem:[%s376 + $0x1e8] sm:$0xff] %v1174
        %1308 = vst [vmem:[%s376 + $0x1f0] sm:$0xff] %v1178
        %1309 = vst [vmem:[%s376 + $0x1f8] sm:$0xff] %v1180
        %s1310 = sand.u32 %s176, 1
        %s1311 = scalar_lea.sflag [#allocation4], %s1310
        %s1312 = sand.u32 %s176, 1
        %s1313 = smul.addr %s1312, 512
        %s1314 = scalar_lea.vmem [#allocation10], %s1313
        %s1315 = sand.u32 %s202, 1
        %s1316 = scalar_lea.sflag [#allocation12], %s1315
        %s1317 = sand.u32 %s202, 1
        %s1318 = smul.addr %s1317, 512
        %s1319 = scalar_lea.vmem [#allocation11], %s1318
        // Predicated region
        $region61: #{tpu_custom_call.1} parent=43 // pred_check
          %p1320 = pneg %p186
        $region62: #{tpu_custom_call.1} parent=43 // pred_check_branch
          %1322 = sbr.rel (%p1320) target = $region64
        $region63: #{tpu_custom_call.1} parent=43 // pred_region
          %s1324 = ssub.s32 8192, 8192
          %1325 = vsyncadd %s1311, %s1324
          %s1326 = smul.addr %s32, 64
          %s1327 = smul.addr %s1326, 128
          %s1328 = scalar_lea.hbm %s6, %s1327
          %s1329 = sshll.u32 %s1314, 4
          %s1330 = int_to_ptr.vmem [resolvable:$true] %s1329
          %1335 = dma.vmem_to_hbm [thread:$0]  %s1330, 8192, %s1328, %s1311, 128, 128, 8
        $region64: #{tpu_custom_call.1} parent=43 // pred_fallthru
          _
        // Predicated region
        $region65: #{tpu_custom_call.1} parent=43 // pred_check
          %p1336 = pneg %p212
        $region66: #{tpu_custom_call.1} parent=43 // pred_check_branch
          %1338 = sbr.rel (%p1336) target = $region68
        $region67: #{tpu_custom_call.1} parent=43 // pred_region
          %s1340 = ssub.s32 8192, 8192
          %1341 = vsyncadd %s1316, %s1340
          %s1342 = smul.addr %s32, 64
          %s1343 = smul.addr %s1342, 128
          %s1344 = scalar_lea.hbm %s7, %s1343
          %s1345 = sshll.u32 %s1319, 4
          %s1346 = int_to_ptr.vmem [resolvable:$true] %s1345
          %1351 = dma.vmem_to_hbm [thread:$0]  %s1346, 8192, %s1344, %s1316, 256, 256, 16
        $region68: #{tpu_custom_call.1} parent=43 // pred_fallthru
          _
      $region44: #{tpu_custom_call.1} parent=5 // pred_fallthru
        _
      %p1352 = scmp.le.s32.totalorder 2, %s27
      // Predicated region
      $region69: #{tpu_custom_call.1} parent=5 // pred_check
        %p1353 = pneg %p1352
      $region70: #{tpu_custom_call.1} parent=5 // pred_check_branch
        %1355 = sbr.rel (%p1353) target = $region72
      $region71: #{tpu_custom_call.1} parent=5 // pred_region
        %s1356 = ssub.s32 %s27, 2
        // Predicated region
        $region73: #{tpu_custom_call.1} parent=71 // pred_check
          %p1357 = pneg %p192
        $region74: #{tpu_custom_call.1} parent=71 // pred_check_branch
          %1359 = sbr.rel (%p1357) target = $region76
        $region75: #{tpu_custom_call.1} parent=71 // pred_region
          %s1360 = sand.u32 %s177, 1
          %s1361 = scalar_lea.sflag [#allocation4], %s1360
          %s1362 = sand.u32 %s177, 1
          %s1363 = smul.addr %s1362, 512
          %s1364 = scalar_lea.vmem [#allocation10], %s1363
          %1365 = dma.done %s1361, 8192
        $region76: #{tpu_custom_call.1} parent=71 // pred_fallthru
          _
        // Predicated region
        $region77: #{tpu_custom_call.1} parent=71 // pred_check
          %p1366 = pneg %p218
        $region78: #{tpu_custom_call.1} parent=71 // pred_check_branch
          %1368 = sbr.rel (%p1366) target = $region80
        $region79: #{tpu_custom_call.1} parent=71 // pred_region
          %s1369 = sand.u32 %s203, 1
          %s1370 = scalar_lea.sflag [#allocation12], %s1369
          %s1371 = sand.u32 %s203, 1
          %s1372 = smul.addr %s1371, 512
          %s1373 = scalar_lea.vmem [#allocation11], %s1372
          %1374 = dma.done %s1370, 8192
        $region80: #{tpu_custom_call.1} parent=71 // pred_fallthru
          _
      $region72: #{tpu_custom_call.1} parent=5 // pred_fallthru
        _
    $region6: #{tpu_custom_call.1} parent=1 // loop_footer
      %s31 = sadd.s32 1, %s27
    $region7: #{tpu_custom_call.1} parent=1 // loop_footer_branch
      %26 = sbr.rel target = $region3
    $region8: #{tpu_custom_call.1} parent=1 // loop_exit
      _
    %1375 = vsyncpa [#allocation3], 1
    %s1376 = scalar_lea.sflag [#allocation3], 1
    %1377 = vsyncpa %s1376, 1
    %1378 = vsyncpa [#allocation6], 1
    %s1379 = scalar_lea.sflag [#allocation6], 1
    %1380 = vsyncpa %s1379, 1
    %1381 = vsyncpa [#allocation9], 1
    %1382 = vsyncpa [#allocation4], 1
    %s1383 = scalar_lea.sflag [#allocation4], 1
    %1384 = vsyncpa %s1383, 1
    %1385 = vsyncpa [#allocation12], 1
    %s1386 = scalar_lea.sflag [#allocation12], 1
    %1387 = vsyncpa %s1386, 1

</llo_original>
